<compile_context>
chip_gen: v7x
topology: tpu7x:2x2x1
jax: 0.10.0
libtpu: 0.0.40
codegen_flags: <defaults>
</compile_context>

<pallas_src>
import functools

import jax
import jax.numpy as jnp
from jax.experimental import pallas as pl
from jax.experimental.pallas import tpu as pltpu


# --------------------------- model configuration ---------------------------

CFG = dict(
    vocab=100, max_pos=16, type_vocab=2,
    hidden=32, heads=2, intermediate=64, layers=2,
    seq=8, batch=2, emoji=16, num_labels=4,
)

VOCAB_PAD = 128  # pad vocab to a full lane for the one-hot gather


# ----------------------------- fused Pallas kernel -----------------------------

def _bert_emoji_kernel(
    # data
    ids_ref, bias_ref, emoji_ref,
    # embeddings
    word_emb_ref, pos_type_ref, emb_g_ref, emb_b_ref,
    # stacked encoder-layer params (leading dim = layer index)
    wqkv_ref, bqkv_ref, wo_ref, bo_ref, ln1_g_ref, ln1_b_ref,
    w1_ref, b1_ref, w2_ref, b2_ref, ln2_g_ref, ln2_b_ref,
    # pooler + heads (classifier pre-split at the concat boundary)
    pool_w_ref, pool_b_ref, fct_w_ref, fct_b_ref, fce_w_ref, fce_b_ref,
    clst_w_ref, clse_w_ref, cls_b_ref,
    # output
    o_ref,
    *, B, S, H, nH, dh, L, eps):
    f32, bf16 = jnp.float32, jnp.bfloat16
    M = B * S
    vpad = word_emb_ref.shape[0]

    def ln(x, g, b):
        mu = jnp.mean(x, axis=-1, keepdims=True)
        var = jnp.mean((x - mu) ** 2, axis=-1, keepdims=True)
        return (x - mu) * jax.lax.rsqrt(var + eps) * g + b

    def mm(a, b):
        # bf16 MXU operands, f32 accumulation
        return jnp.dot(a.astype(bf16), b.astype(bf16), preferred_element_type=f32)

    # --- embeddings: one-hot token gather on the MXU + pre-summed pos/type + LN ---
    ids = ids_ref[...]                                              # (M, 1) int32
    col = jax.lax.broadcasted_iota(jnp.int32, (M, vpad), 1)
    onehot = (ids == col).astype(bf16)                              # (M, 128)
    word = jnp.dot(onehot, word_emb_ref[...], preferred_element_type=f32)   # (M, H)
    h = ln(word + pos_type_ref[...], emb_g_ref[...], emb_b_ref[...])        # (M, H)

    # (B*nH*S, B*nH*S) block-diagonal additive mask (padding folded in, precomputed)
    bias = bias_ref[...]

    def pack(x):
        # (M, H) with head-blocked columns -> (B*nH*S, dh), row order (b, head, s)
        return jnp.concatenate(
            [x[b * S:(b + 1) * S, hd * dh:(hd + 1) * dh]
             for b in range(B) for hd in range(nH)], axis=0)

    # --- encoder layers, statically unrolled; everything stays in VMEM/vregs ---
    for l in range(L):
        # fused QKV projection (Q columns pre-scaled by 1/sqrt(dh) in prepare_params)
        qkv = mm(h, wqkv_ref[l]) + bqkv_ref[l]                      # (M, 3H) f32
        q = pack(qkv[:, 0:H])                                       # (GS, dh)
        k = pack(qkv[:, H:2 * H])
        v = pack(qkv[:, 2 * H:3 * H])

        # one block-diagonal attention problem for all (batch, head) pairs
        s = mm(q, k.T) + bias                                       # (GS, GS)
        s = s - jnp.max(s, axis=-1, keepdims=True)
        p = jnp.exp(s)
        p = p * pl.reciprocal(jnp.sum(p, axis=-1, keepdims=True), approx=True)
        ctx = mm(p, v)                                              # (GS, dh)

        # unpack (b, head, s) rows back to (M, H) with head-blocked columns
        ctx_full = jnp.concatenate(
            [jnp.concatenate(
                [ctx[(b * nH + hd) * S:(b * nH + hd + 1) * S, :] for hd in range(nH)],
                axis=1)
             for b in range(B)], axis=0)                            # (M, H)

        attn_out = mm(ctx_full, wo_ref[l]) + bo_ref[l]
        h = ln(h + attn_out, ln1_g_ref[l], ln1_b_ref[l])

        inter = mm(h, w1_ref[l]) + b1_ref[l]
        # TODO(synk): HF BERT uses exact erf-GELU; tanh approximation used here.
        inter = jax.nn.gelu(inter, approximate=True)
        ffn = mm(inter, w2_ref[l]) + b2_ref[l]
        h = ln(h + ffn, ln2_g_ref[l], ln2_b_ref[l])

    # --- pooler on [CLS] rows (selected via tiny one-hot matmul, tile aligned) ---
    ridx = jax.lax.broadcasted_iota(jnp.int32, (B, M), 0)
    cidx = jax.lax.broadcasted_iota(jnp.int32, (B, M), 1)
    sel = (cidx == ridx * S).astype(bf16)                           # (B, M)
    cls_h = jnp.dot(sel, h.astype(bf16), preferred_element_type=f32)  # (B, H)
    pooled = jnp.tanh(mm(cls_h, pool_w_ref[...]) + pool_b_ref[...])

    text_feat = mm(pooled, fct_w_ref[...]) + fct_b_ref[...]
    emoji_feat = mm(emoji_ref[...], fce_w_ref[...]) + fce_b_ref[...]
    # nn.Dropout(0.3): identity in eval mode.
    # classifier split at the concat boundary -> the (B, 160) concat never materializes
    logits = mm(text_feat, clst_w_ref[...]) + mm(emoji_feat, clse_w_ref[...]) + cls_b_ref[...]
    o_ref[...] = logits.astype(o_ref.dtype)


# ------------------------- one-time parameter packing -------------------------

def prepare_params(params, cfg):
    """Hoisted out of the forward: stacking, fused QKV, bf16 casts, vocab pad."""
    H = cfg["hidden"]
    nH, S, B = cfg["heads"], cfg["seq"], cfg["batch"]
    dh = H // nH
    scale = 1.0 / (dh ** 0.5)
    bf16, f32 = jnp.bfloat16, jnp.float32
    lps = params["layers"]

    mat = lambda n: jnp.stack([lp[n] for lp in lps]).astype(bf16)          # (L,d1,d2)
    row = lambda n: jnp.stack([lp[n][None, :] for lp in lps]).astype(f32)  # (L,1,d)

    # fused QKV; fold the 1/sqrt(dh) attention scale into the Q columns
    wqkv = jnp.stack(
        [jnp.concatenate([lp["wq"] * scale, lp["wk"], lp["wv"]], axis=1)
         for lp in lps]).astype(bf16)                                       # (L,H,3H)
    bqkv = jnp.stack(
        [jnp.concatenate([lp["bq"] * scale, lp["bk"], lp["bv"]])[None, :]
         for lp in lps]).astype(f32)                                        # (L,1,3H)

    # vocab padded to 128 -> exact-lane one-hot, clean K=128 MXU contraction
    word = jnp.zeros((VOCAB_PAD, H), f32)
    word = word.at[:params["word_emb"].shape[0]].set(params["word_emb"]).astype(bf16)

    # TODO(synk): token_type_ids hard-coded to all-zero (type_emb[0]).
    pos_type = (params["pos_emb"][:S] + params["type_emb"][0][None, :]).astype(f32)
    pos_type = jnp.tile(pos_type, (B, 1))                                   # (B*S, H)

    nt = params["fc_text_b"].shape[0]
    return dict(
        word_emb=word, pos_type=pos_type,
        emb_g=params["emb_ln_g"][None, :].astype(f32),
        emb_b=params["emb_ln_b"][None, :].astype(f32),
        wqkv=wqkv, bqkv=bqkv,
        wo=mat("wo"), bo=row("bo"), ln1_g=row("ln1_g"), ln1_b=row("ln1_b"),
        w1=mat("w1"), b1=row("b1"), w2=mat("w2"), b2=row("b2"),
        ln2_g=row("ln2_g"), ln2_b=row("ln2_b"),
        pool_w=params["pool_w"].astype(bf16), pool_b=params["pool_b"][None, :].astype(f32),
        fct_w=params["fc_text_w"].astype(bf16), fct_b=params["fc_text_b"][None, :].astype(f32),
        fce_w=params["fc_emoji_w"].astype(bf16), fce_b=params["fc_emoji_b"][None, :].astype(f32),
        clst_w=params["cls_w"][:nt].astype(bf16),
        clse_w=params["cls_w"][nt:].astype(bf16),
        cls_b=params["cls_b"][None, :].astype(f32),
    )


# ------------------------------ host-side wrapper ------------------------------

def bert_with_emoji_forward(prepped, input_ids, attention_mask, emoji_features, cfg):
    B, S = input_ids.shape
    H, nH, L = cfg["hidden"], cfg["heads"], cfg["layers"]
    dh = H // nH
    GS = B * nH * S

    ids = input_ids.reshape(B * S, 1).astype(jnp.int32)

    # block-diagonal additive mask: 0 on the per-(batch,head) diagonal 8x8 blocks
    # where the key is unmasked, -1e9 everywhere else (padding mask folded in)
    mask_f = attention_mask.astype(jnp.float32)                       # (B, S)
    key_bias = (jnp.repeat(mask_f, nH, axis=0).reshape(1, GS) - 1.0) * 1e9
    gid = jnp.arange(GS, dtype=jnp.int32) // S
    same_block = gid[:, None] == gid[None, :]
    block_bias = jnp.where(same_block, key_bias, jnp.float32(-1e9))   # (GS, GS)

    p = prepped
    args = (
        ids, block_bias, emoji_features.astype(jnp.float32),
        p["word_emb"], p["pos_type"], p["emb_g"], p["emb_b"],
        p["wqkv"], p["bqkv"], p["wo"], p["bo"], p["ln1_g"], p["ln1_b"],
        p["w1"], p["b1"], p["w2"], p["b2"], p["ln2_g"], p["ln2_b"],
        p["pool_w"], p["pool_b"], p["fct_w"], p["fct_b"], p["fce_w"], p["fce_b"],
        p["clst_w"], p["clse_w"], p["cls_b"],
    )
    vmem = pl.BlockSpec(memory_space=pltpu.MemorySpace.VMEM)
    return pl.pallas_call(
        functools.partial(_bert_emoji_kernel,
                          B=B, S=S, H=H, nH=nH, dh=dh, L=L, eps=1e-12),
        out_shape=jax.ShapeDtypeStruct((B, cfg["num_labels"]), jnp.float32),
        in_specs=[vmem] * len(args),
        out_specs=vmem,
    )(*args)


# -------------------------------- parameters --------------------------------

def init_params(key, cfg):
    n_needed = 16 + cfg["layers"] * 20
    keys = iter(jax.random.split(key, n_needed))

    def nrm(shape, scale=0.02):
        return scale * jax.random.normal(next(keys), shape, jnp.float32)

    H, I = cfg["hidden"], cfg["intermediate"]
    p = {
        "word_emb": nrm((cfg["vocab"], H)),
        "pos_emb": nrm((cfg["max_pos"], H)),
        "type_emb": nrm((cfg["type_vocab"], H)),
        "emb_ln_g": jnp.ones((H,), jnp.float32),
        "emb_ln_b": jnp.zeros((H,), jnp.float32),
        "pool_w": nrm((H, H)), "pool_b": jnp.zeros((H,), jnp.float32),
        "fc_text_w": nrm((H, 128)), "fc_text_b": jnp.zeros((128,), jnp.float32),
        "fc_emoji_w": nrm((cfg["emoji"], 32)), "fc_emoji_b": jnp.zeros((32,), jnp.float32),
        "cls_w": nrm((128 + 32, cfg["num_labels"])),
        "cls_b": jnp.zeros((cfg["num_labels"],), jnp.float32),
        "layers": [],
    }
    for _ in range(cfg["layers"]):
        p["layers"].append({
            "wq": nrm((H, H)), "bq": jnp.zeros((H,), jnp.float32),
            "wk": nrm((H, H)), "bk": jnp.zeros((H,), jnp.float32),
            "wv": nrm((H, H)), "bv": jnp.zeros((H,), jnp.float32),
            "wo": nrm((H, H)), "bo": jnp.zeros((H,), jnp.float32),
            "ln1_g": jnp.ones((H,), jnp.float32), "ln1_b": jnp.zeros((H,), jnp.float32),
            "w1": nrm((H, I)), "b1": jnp.zeros((I,), jnp.float32),
            "w2": nrm((I, H)), "b2": jnp.zeros((H,), jnp.float32),
            "ln2_g": jnp.ones((H,), jnp.float32), "ln2_b": jnp.zeros((H,), jnp.float32),
        })
    return p


# ------------------------ pure-JAX reference (validation) ------------------------

def _reference_forward(params, input_ids, attention_mask, emoji_features, cfg):
    B, S = input_ids.shape
    H, nH = cfg["hidden"], cfg["heads"]
    dh = H // nH

    def ln(x, g, b):
        mu = x.mean(-1, keepdims=True)
        var = ((x - mu) ** 2).mean(-1, keepdims=True)
        return (x - mu) * jax.lax.rsqrt(var + 1e-12) * g + b

    emb = (params["word_emb"][input_ids]
           + params["pos_emb"][jnp.arange(S)][None]
           + params["type_emb"][0][None, None, :])
    h = ln(emb, params["emb_ln_g"], params["emb_ln_b"])                     # (B,S,H)
    bias = (1.0 - attention_mask.astype(jnp.float32)) * -1e9                # (B,S)
    for lp in params["layers"]:
        q = (h @ lp["wq"] + lp["bq"]).reshape(B, S, nH, dh).transpose(0, 2, 1, 3)
        k = (h @ lp["wk"] + lp["bk"]).reshape(B, S, nH, dh).transpose(0, 2, 1, 3)
        v = (h @ lp["wv"] + lp["bv"]).reshape(B, S, nH, dh).transpose(0, 2, 1, 3)
        s = jnp.einsum("bhqd,bhkd->bhqk", q, k) / (dh ** 0.5) + bias[:, None, None, :]
        p = jax.nn.softmax(s, axis=-1)
        ctx = jnp.einsum("bhqk,bhkd->bhqd", p, v).transpose(0, 2, 1, 3).reshape(B, S, H)
        h = ln(h + ctx @ lp["wo"] + lp["bo"], lp["ln1_g"], lp["ln1_b"])
        inter = jax.nn.gelu(h @ lp["w1"] + lp["b1"], approximate=True)
        h = ln(h + inter @ lp["w2"] + lp["b2"], lp["ln2_g"], lp["ln2_b"])
    pooled = jnp.tanh(h[:, 0] @ params["pool_w"] + params["pool_b"])
    text = pooled @ params["fc_text_w"] + params["fc_text_b"]
    emo = emoji_features @ params["fc_emoji_w"] + params["fc_emoji_b"]
    comb = jnp.concatenate([text, emo], axis=1)
    return comb @ params["cls_w"] + params["cls_b"]


# ---------------------------------- main ----------------------------------

if __name__ == "__main__":
    key = jax.random.PRNGKey(0)
    k_par, k_ids, k_emoji = jax.random.split(key, 3)

    params = init_params(k_par, CFG)
    prepped = prepare_params(params, CFG)          # one-time packing, hoisted off the call path

    B, S = CFG["batch"], CFG["seq"]
    input_ids = jax.random.randint(k_ids, (B, S), 0, CFG["vocab"], dtype=jnp.int32)
    attention_mask = jnp.ones((B, S), jnp.int32).at[1, S - 2:].set(0)  # pad last 2 of row 1
    emoji_features = jax.random.normal(k_emoji, (B, CFG["emoji"]), jnp.float32)

    fwd = jax.jit(functools.partial(bert_with_emoji_forward, cfg=CFG))
    logits = fwd(prepped, input_ids, attention_mask, emoji_features)
    logits = jax.block_until_ready(logits)

    assert logits.shape == (B, CFG["num_labels"])
    assert bool(jnp.all(jnp.isfinite(logits)))

    # sanity-check the fused kernel against a plain-JAX f32 reference
    # (tolerances account for bf16 MXU operands + approx reciprocal in softmax)
    with jax.default_matmul_precision("float32"):
        ref = _reference_forward(params, input_ids, attention_mask, emoji_features, CFG)
    assert bool(jnp.allclose(logits, ref, rtol=5e-2, atol=1e-3))

    print("KERNEL_OK")
</pallas_src>

<mosaic_0001>
module attributes {stable_mosaic.version = 11 : i64} {
  func.func @_bert_emoji_kernel(%arg0: memref<16x1xi32, #tpu.memory_space<vmem>>, %arg1: memref<32x32xf32, #tpu.memory_space<vmem>>, %arg2: memref<2x16xf32, #tpu.memory_space<vmem>>, %arg3: memref<128x32xbf16, #tpu.memory_space<vmem>>, %arg4: memref<16x32xf32, #tpu.memory_space<vmem>>, %arg5: memref<1x32xf32, #tpu.memory_space<vmem>>, %arg6: memref<1x32xf32, #tpu.memory_space<vmem>>, %arg7: memref<2x32x96xbf16, #tpu.memory_space<vmem>>, %arg8: memref<2x1x96xf32, #tpu.memory_space<vmem>>, %arg9: memref<2x32x32xbf16, #tpu.memory_space<vmem>>, %arg10: memref<2x1x32xf32, #tpu.memory_space<vmem>>, %arg11: memref<2x1x32xf32, #tpu.memory_space<vmem>>, %arg12: memref<2x1x32xf32, #tpu.memory_space<vmem>>, %arg13: memref<2x32x64xbf16, #tpu.memory_space<vmem>>, %arg14: memref<2x1x64xf32, #tpu.memory_space<vmem>>, %arg15: memref<2x64x32xbf16, #tpu.memory_space<vmem>>, %arg16: memref<2x1x32xf32, #tpu.memory_space<vmem>>, %arg17: memref<2x1x32xf32, #tpu.memory_space<vmem>>, %arg18: memref<2x1x32xf32, #tpu.memory_space<vmem>>, %arg19: memref<32x32xbf16, #tpu.memory_space<vmem>>, %arg20: memref<1x32xf32, #tpu.memory_space<vmem>>, %arg21: memref<32x128xbf16, #tpu.memory_space<vmem>>, %arg22: memref<1x128xf32, #tpu.memory_space<vmem>>, %arg23: memref<16x32xbf16, #tpu.memory_space<vmem>>, %arg24: memref<1x32xf32, #tpu.memory_space<vmem>>, %arg25: memref<128x4xbf16, #tpu.memory_space<vmem>>, %arg26: memref<32x4xbf16, #tpu.memory_space<vmem>>, %arg27: memref<1x4xf32, #tpu.memory_space<vmem>>, %arg28: memref<2x4xf32, #tpu.memory_space<vmem>>) attributes {dimension_semantics = [], scalar_prefetch = 0 : i64, scratch_operands = 0 : i64, tpu.core_type = #tpu.core_type<tc>} {
    %c0 = arith.constant 0 : index
    %c0_0 = arith.constant 0 : index
    %0 = vector.load %arg0[%c0, %c0_0] : memref<16x1xi32, #tpu.memory_space<vmem>>, vector<16x1xi32>
    %1 = tpu.iota {dimensions = array<i32: 1>} : vector<16x128xi32>
    %2 = vector.broadcast %0 : vector<16x1xi32> to vector<16x128xi32>
    %3 = arith.cmpi eq, %2, %1 : vector<16x128xi32>
    %4 = arith.extui %3 : vector<16x128xi1> to vector<16x128xi32>
    %5 = arith.sitofp %4 : vector<16x128xi32> to vector<16x128xf32>
    %6 = arith.truncf %5 : vector<16x128xf32> to vector<16x128xbf16>
    %c0_1 = arith.constant 0 : index
    %c0_2 = arith.constant 0 : index
    %7 = vector.load %arg3[%c0_1, %c0_2] : memref<128x32xbf16, #tpu.memory_space<vmem>>, vector<128x32xbf16>
    %cst = arith.constant dense<0.000000e+00> : vector<16x32xf32>
    %8 = tpu.matmul %6, %7, %cst {dimension_numbers = #tpu.dot_dimension_numbers<[1], [0], [0], [1], [0, 0, 1, 1], [], []>} : vector<16x128xbf16>, vector<128x32xbf16>, vector<16x32xf32> -> vector<16x32xf32>
    %c0_3 = arith.constant 0 : index
    %c0_4 = arith.constant 0 : index
    %9 = vector.load %arg4[%c0_3, %c0_4] : memref<16x32xf32, #tpu.memory_space<vmem>>, vector<16x32xf32>
    %10 = arith.addf %8, %9 : vector<16x32xf32>
    %c0_5 = arith.constant 0 : index
    %c0_6 = arith.constant 0 : index
    %11 = vector.load %arg5[%c0_5, %c0_6] : memref<1x32xf32, #tpu.memory_space<vmem>>, vector<1x32xf32>
    %c0_7 = arith.constant 0 : index
    %c0_8 = arith.constant 0 : index
    %12 = vector.load %arg6[%c0_7, %c0_8] : memref<1x32xf32, #tpu.memory_space<vmem>>, vector<1x32xf32>
    %cst_9 = arith.constant dense<0.000000e+00> : vector<16xf32>
    %13 = vector.multi_reduction <add>, %10, %cst_9 [1] : vector<16x32xf32> to vector<16xf32>
    %14 = vector.shape_cast %13 : vector<16xf32> to vector<16x1xf32>
    %cst_10 = arith.constant 3.200000e+01 : f32
    %15 = vector.broadcast %cst_10 : f32 to vector<16x1xf32>
    %16 = arith.divf %14, %15 : vector<16x1xf32>
    %17 = vector.broadcast %16 : vector<16x1xf32> to vector<16x32xf32>
    %18 = arith.subf %10, %17 : vector<16x32xf32>
    %19 = arith.mulf %18, %18 : vector<16x32xf32>
    %cst_11 = arith.constant dense<0.000000e+00> : vector<16xf32>
    %20 = vector.multi_reduction <add>, %19, %cst_11 [1] : vector<16x32xf32> to vector<16xf32>
    %21 = vector.shape_cast %20 : vector<16xf32> to vector<16x1xf32>
    %cst_12 = arith.constant 3.200000e+01 : f32
    %22 = vector.broadcast %cst_12 : f32 to vector<16x1xf32>
    %23 = arith.divf %21, %22 : vector<16x1xf32>
    %24 = vector.broadcast %16 : vector<16x1xf32> to vector<16x32xf32>
    %25 = arith.subf %10, %24 : vector<16x32xf32>
    %cst_13 = arith.constant 9.99999996E-13 : f32
    %26 = vector.broadcast %cst_13 : f32 to vector<16x1xf32>
    %27 = arith.addf %23, %26 : vector<16x1xf32>
    %28 = math.rsqrt %27 : vector<16x1xf32>
    %29 = vector.broadcast %28 : vector<16x1xf32> to vector<16x32xf32>
    %30 = arith.mulf %25, %29 : vector<16x32xf32>
    %31 = vector.broadcast %11 : vector<1x32xf32> to vector<16x32xf32>
    %32 = arith.mulf %30, %31 : vector<16x32xf32>
    %33 = vector.broadcast %12 : vector<1x32xf32> to vector<16x32xf32>
    %34 = arith.addf %32, %33 : vector<16x32xf32>
    %c0_14 = arith.constant 0 : index
    %c0_15 = arith.constant 0 : index
    %35 = vector.load %arg1[%c0_14, %c0_15] : memref<32x32xf32, #tpu.memory_space<vmem>>, vector<32x32xf32>
    %c0_16 = arith.constant 0 : index
    %c0_17 = arith.constant 0 : index
    %c0_18 = arith.constant 0 : index
    %36 = vector.load %arg7[%c0_16, %c0_17, %c0_18] : memref<2x32x96xbf16, #tpu.memory_space<vmem>>, vector<1x32x96xbf16>
    %37 = vector.shape_cast %36 : vector<1x32x96xbf16> to vector<32x96xbf16>
    %38 = arith.truncf %34 : vector<16x32xf32> to vector<16x32xbf16>
    %cst_19 = arith.constant dense<0.000000e+00> : vector<16x96xf32>
    %39 = tpu.matmul %38, %37, %cst_19 {dimension_numbers = #tpu.dot_dimension_numbers<[1], [0], [0], [1], [0, 0, 1, 1], [], []>} : vector<16x32xbf16>, vector<32x96xbf16>, vector<16x96xf32> -> vector<16x96xf32>
    %c0_20 = arith.constant 0 : index
    %c0_21 = arith.constant 0 : index
    %c0_22 = arith.constant 0 : index
    %40 = vector.load %arg8[%c0_20, %c0_21, %c0_22] : memref<2x1x96xf32, #tpu.memory_space<vmem>>, vector<1x1x96xf32>
    %41 = vector.shape_cast %40 : vector<1x1x96xf32> to vector<1x96xf32>
    %42 = vector.broadcast %41 : vector<1x96xf32> to vector<16x96xf32>
    %43 = arith.addf %39, %42 : vector<16x96xf32>
    %44 = vector.extract_strided_slice %43 {offsets = [0, 0], sizes = [16, 32], strides = [1, 1]} : vector<16x96xf32> to vector<16x32xf32>
    %45 = vector.extract_strided_slice %44 {offsets = [0, 0], sizes = [8, 16], strides = [1, 1]} : vector<16x32xf32> to vector<8x16xf32>
    %46 = vector.extract_strided_slice %44 {offsets = [0, 16], sizes = [8, 16], strides = [1, 1]} : vector<16x32xf32> to vector<8x16xf32>
    %47 = vector.extract_strided_slice %44 {offsets = [8, 0], sizes = [8, 16], strides = [1, 1]} : vector<16x32xf32> to vector<8x16xf32>
    %48 = vector.extract_strided_slice %44 {offsets = [8, 16], sizes = [8, 16], strides = [1, 1]} : vector<16x32xf32> to vector<8x16xf32>
    %49 = tpu.concatenate %45, %46, %47, %48 in 0 : vector<8x16xf32>, vector<8x16xf32>, vector<8x16xf32>, vector<8x16xf32> -> vector<32x16xf32>
    %50 = vector.extract_strided_slice %43 {offsets = [0, 32], sizes = [16, 32], strides = [1, 1]} : vector<16x96xf32> to vector<16x32xf32>
    %51 = vector.extract_strided_slice %50 {offsets = [0, 0], sizes = [8, 16], strides = [1, 1]} : vector<16x32xf32> to vector<8x16xf32>
    %52 = vector.extract_strided_slice %50 {offsets = [0, 16], sizes = [8, 16], strides = [1, 1]} : vector<16x32xf32> to vector<8x16xf32>
    %53 = vector.extract_strided_slice %50 {offsets = [8, 0], sizes = [8, 16], strides = [1, 1]} : vector<16x32xf32> to vector<8x16xf32>
    %54 = vector.extract_strided_slice %50 {offsets = [8, 16], sizes = [8, 16], strides = [1, 1]} : vector<16x32xf32> to vector<8x16xf32>
    %55 = tpu.concatenate %51, %52, %53, %54 in 0 : vector<8x16xf32>, vector<8x16xf32>, vector<8x16xf32>, vector<8x16xf32> -> vector<32x16xf32>
    %56 = vector.extract_strided_slice %43 {offsets = [0, 64], sizes = [16, 32], strides = [1, 1]} : vector<16x96xf32> to vector<16x32xf32>
    %57 = vector.extract_strided_slice %56 {offsets = [0, 0], sizes = [8, 16], strides = [1, 1]} : vector<16x32xf32> to vector<8x16xf32>
    %58 = vector.extract_strided_slice %56 {offsets = [0, 16], sizes = [8, 16], strides = [1, 1]} : vector<16x32xf32> to vector<8x16xf32>
    %59 = vector.extract_strided_slice %56 {offsets = [8, 0], sizes = [8, 16], strides = [1, 1]} : vector<16x32xf32> to vector<8x16xf32>
    %60 = vector.extract_strided_slice %56 {offsets = [8, 16], sizes = [8, 16], strides = [1, 1]} : vector<16x32xf32> to vector<8x16xf32>
    %61 = tpu.concatenate %57, %58, %59, %60 in 0 : vector<8x16xf32>, vector<8x16xf32>, vector<8x16xf32>, vector<8x16xf32> -> vector<32x16xf32>
    %62 = tpu.transpose %55, [1, 0] : vector<32x16xf32> -> vector<16x32xf32>
    %63 = arith.truncf %49 : vector<32x16xf32> to vector<32x16xbf16>
    %64 = arith.truncf %62 : vector<16x32xf32> to vector<16x32xbf16>
    %cst_23 = arith.constant dense<0.000000e+00> : vector<32x32xf32>
    %65 = tpu.matmul %63, %64, %cst_23 {dimension_numbers = #tpu.dot_dimension_numbers<[1], [0], [0], [1], [0, 0, 1, 1], [], []>} : vector<32x16xbf16>, vector<16x32xbf16>, vector<32x32xf32> -> vector<32x32xf32>
    %66 = arith.addf %65, %35 : vector<32x32xf32>
    %cst_24 = arith.constant dense<0xFF800000> : vector<32xf32>
    %67 = vector.multi_reduction <maximumf>, %66, %cst_24 [1] : vector<32x32xf32> to vector<32xf32>
    %68 = vector.shape_cast %67 : vector<32xf32> to vector<32x1xf32>
    %69 = vector.broadcast %68 : vector<32x1xf32> to vector<32x32xf32>
    %70 = arith.subf %66, %69 : vector<32x32xf32>
    %71 = math.exp %70 : vector<32x32xf32>
    %cst_25 = arith.constant dense<0.000000e+00> : vector<32xf32>
    %72 = vector.multi_reduction <add>, %71, %cst_25 [1] : vector<32x32xf32> to vector<32xf32>
    %73 = vector.shape_cast %72 : vector<32xf32> to vector<32x1xf32>
    %74 = tpu.reciprocal %73 {approx = true} : vector<32x1xf32> -> vector<32x1xf32>
    %75 = vector.broadcast %74 : vector<32x1xf32> to vector<32x32xf32>
    %76 = arith.mulf %71, %75 : vector<32x32xf32>
    %77 = arith.truncf %76 : vector<32x32xf32> to vector<32x32xbf16>
    %78 = arith.truncf %61 : vector<32x16xf32> to vector<32x16xbf16>
    %cst_26 = arith.constant dense<0.000000e+00> : vector<32x16xf32>
    %79 = tpu.matmul %77, %78, %cst_26 {dimension_numbers = #tpu.dot_dimension_numbers<[1], [0], [0], [1], [0, 0, 1, 1], [], []>} : vector<32x32xbf16>, vector<32x16xbf16>, vector<32x16xf32> -> vector<32x16xf32>
    %80 = vector.extract_strided_slice %79 {offsets = [0, 0], sizes = [8, 16], strides = [1, 1]} : vector<32x16xf32> to vector<8x16xf32>
    %81 = vector.extract_strided_slice %79 {offsets = [8, 0], sizes = [8, 16], strides = [1, 1]} : vector<32x16xf32> to vector<8x16xf32>
    %82 = tpu.concatenate %80, %81 in 1 : vector<8x16xf32>, vector<8x16xf32> -> vector<8x32xf32>
    %83 = vector.extract_strided_slice %79 {offsets = [16, 0], sizes = [8, 16], strides = [1, 1]} : vector<32x16xf32> to vector<8x16xf32>
    %84 = vector.extract_strided_slice %79 {offsets = [24, 0], sizes = [8, 16], strides = [1, 1]} : vector<32x16xf32> to vector<8x16xf32>
    %85 = tpu.concatenate %83, %84 in 1 : vector<8x16xf32>, vector<8x16xf32> -> vector<8x32xf32>
    %86 = tpu.concatenate %82, %85 in 0 : vector<8x32xf32>, vector<8x32xf32> -> vector<16x32xf32>
    %c0_27 = arith.constant 0 : index
    %c0_28 = arith.constant 0 : index
    %c0_29 = arith.constant 0 : index
    %87 = vector.load %arg9[%c0_27, %c0_28, %c0_29] : memref<2x32x32xbf16, #tpu.memory_space<vmem>>, vector<1x32x32xbf16>
    %88 = vector.shape_cast %87 : vector<1x32x32xbf16> to vector<32x32xbf16>
    %89 = arith.truncf %86 : vector<16x32xf32> to vector<16x32xbf16>
    %cst_30 = arith.constant dense<0.000000e+00> : vector<16x32xf32>
    %90 = tpu.matmul %89, %88, %cst_30 {dimension_numbers = #tpu.dot_dimension_numbers<[1], [0], [0], [1], [0, 0, 1, 1], [], []>} : vector<16x32xbf16>, vector<32x32xbf16>, vector<16x32xf32> -> vector<16x32xf32>
    %c0_31 = arith.constant 0 : index
    %c0_32 = arith.constant 0 : index
    %c0_33 = arith.constant 0 : index
    %91 = vector.load %arg10[%c0_31, %c0_32, %c0_33] : memref<2x1x32xf32, #tpu.memory_space<vmem>>, vector<1x1x32xf32>
    %92 = vector.shape_cast %91 : vector<1x1x32xf32> to vector<1x32xf32>
    %93 = vector.broadcast %92 : vector<1x32xf32> to vector<16x32xf32>
    %94 = arith.addf %90, %93 : vector<16x32xf32>
    %95 = arith.addf %34, %94 : vector<16x32xf32>
    %c0_34 = arith.constant 0 : index
    %c0_35 = arith.constant 0 : index
    %c0_36 = arith.constant 0 : index
    %96 = vector.load %arg11[%c0_34, %c0_35, %c0_36] : memref<2x1x32xf32, #tpu.memory_space<vmem>>, vector<1x1x32xf32>
    %97 = vector.shape_cast %96 : vector<1x1x32xf32> to vector<1x32xf32>
    %c0_37 = arith.constant 0 : index
    %c0_38 = arith.constant 0 : index
    %c0_39 = arith.constant 0 : index
    %98 = vector.load %arg12[%c0_37, %c0_38, %c0_39] : memref<2x1x32xf32, #tpu.memory_space<vmem>>, vector<1x1x32xf32>
    %99 = vector.shape_cast %98 : vector<1x1x32xf32> to vector<1x32xf32>
    %cst_40 = arith.constant dense<0.000000e+00> : vector<16xf32>
    %100 = vector.multi_reduction <add>, %95, %cst_40 [1] : vector<16x32xf32> to vector<16xf32>
    %101 = vector.shape_cast %100 : vector<16xf32> to vector<16x1xf32>
    %cst_41 = arith.constant 3.200000e+01 : f32
    %102 = vector.broadcast %cst_41 : f32 to vector<16x1xf32>
    %103 = arith.divf %101, %102 : vector<16x1xf32>
    %104 = vector.broadcast %103 : vector<16x1xf32> to vector<16x32xf32>
    %105 = arith.subf %95, %104 : vector<16x32xf32>
    %106 = arith.mulf %105, %105 : vector<16x32xf32>
    %cst_42 = arith.constant dense<0.000000e+00> : vector<16xf32>
    %107 = vector.multi_reduction <add>, %106, %cst_42 [1] : vector<16x32xf32> to vector<16xf32>
    %108 = vector.shape_cast %107 : vector<16xf32> to vector<16x1xf32>
    %cst_43 = arith.constant 3.200000e+01 : f32
    %109 = vector.broadcast %cst_43 : f32 to vector<16x1xf32>
    %110 = arith.divf %108, %109 : vector<16x1xf32>
    %111 = vector.broadcast %103 : vector<16x1xf32> to vector<16x32xf32>
    %112 = arith.subf %95, %111 : vector<16x32xf32>
    %cst_44 = arith.constant 9.99999996E-13 : f32
    %113 = vector.broadcast %cst_44 : f32 to vector<16x1xf32>
    %114 = arith.addf %110, %113 : vector<16x1xf32>
    %115 = math.rsqrt %114 : vector<16x1xf32>
    %116 = vector.broadcast %115 : vector<16x1xf32> to vector<16x32xf32>
    %117 = arith.mulf %112, %116 : vector<16x32xf32>
    %118 = vector.broadcast %97 : vector<1x32xf32> to vector<16x32xf32>
    %119 = arith.mulf %117, %118 : vector<16x32xf32>
    %120 = vector.broadcast %99 : vector<1x32xf32> to vector<16x32xf32>
    %121 = arith.addf %119, %120 : vector<16x32xf32>
    %c0_45 = arith.constant 0 : index
    %c0_46 = arith.constant 0 : index
    %c0_47 = arith.constant 0 : index
    %122 = vector.load %arg13[%c0_45, %c0_46, %c0_47] : memref<2x32x64xbf16, #tpu.memory_space<vmem>>, vector<1x32x64xbf16>
    %123 = vector.shape_cast %122 : vector<1x32x64xbf16> to vector<32x64xbf16>
    %124 = arith.truncf %121 : vector<16x32xf32> to vector<16x32xbf16>
    %cst_48 = arith.constant dense<0.000000e+00> : vector<16x64xf32>
    %125 = tpu.matmul %124, %123, %cst_48 {dimension_numbers = #tpu.dot_dimension_numbers<[1], [0], [0], [1], [0, 0, 1, 1], [], []>} : vector<16x32xbf16>, vector<32x64xbf16>, vector<16x64xf32> -> vector<16x64xf32>
    %c0_49 = arith.constant 0 : index
    %c0_50 = arith.constant 0 : index
    %c0_51 = arith.constant 0 : index
    %126 = vector.load %arg14[%c0_49, %c0_50, %c0_51] : memref<2x1x64xf32, #tpu.memory_space<vmem>>, vector<1x1x64xf32>
    %127 = vector.shape_cast %126 : vector<1x1x64xf32> to vector<1x64xf32>
    %128 = vector.broadcast %127 : vector<1x64xf32> to vector<16x64xf32>
    %129 = arith.addf %125, %128 : vector<16x64xf32>
    %130 = arith.mulf %129, %129 : vector<16x64xf32>
    %131 = arith.mulf %129, %130 : vector<16x64xf32>
    %cst_52 = arith.constant 4.471500e-02 : f32
    %132 = vector.broadcast %cst_52 : f32 to vector<16x64xf32>
    %133 = arith.mulf %132, %131 : vector<16x64xf32>
    %134 = arith.addf %129, %133 : vector<16x64xf32>
    %cst_53 = arith.constant 0.797884583 : f32
    %135 = vector.broadcast %cst_53 : f32 to vector<16x64xf32>
    %136 = arith.mulf %135, %134 : vector<16x64xf32>
    %137 = math.tanh %136 : vector<16x64xf32>
    %cst_54 = arith.constant 1.000000e+00 : f32
    %138 = vector.broadcast %cst_54 : f32 to vector<16x64xf32>
    %139 = arith.addf %138, %137 : vector<16x64xf32>
    %cst_55 = arith.constant 5.000000e-01 : f32
    %140 = vector.broadcast %cst_55 : f32 to vector<16x64xf32>
    %141 = arith.mulf %140, %139 : vector<16x64xf32>
    %142 = arith.mulf %129, %141 : vector<16x64xf32>
    %c0_56 = arith.constant 0 : index
    %c0_57 = arith.constant 0 : index
    %c0_58 = arith.constant 0 : index
    %143 = vector.load %arg15[%c0_56, %c0_57, %c0_58] : memref<2x64x32xbf16, #tpu.memory_space<vmem>>, vector<1x64x32xbf16>
    %144 = vector.shape_cast %143 : vector<1x64x32xbf16> to vector<64x32xbf16>
    %145 = arith.truncf %142 : vector<16x64xf32> to vector<16x64xbf16>
    %cst_59 = arith.constant dense<0.000000e+00> : vector<16x32xf32>
    %146 = tpu.matmul %145, %144, %cst_59 {dimension_numbers = #tpu.dot_dimension_numbers<[1], [0], [0], [1], [0, 0, 1, 1], [], []>} : vector<16x64xbf16>, vector<64x32xbf16>, vector<16x32xf32> -> vector<16x32xf32>
    %c0_60 = arith.constant 0 : index
    %c0_61 = arith.constant 0 : index
    %c0_62 = arith.constant 0 : index
    %147 = vector.load %arg16[%c0_60, %c0_61, %c0_62] : memref<2x1x32xf32, #tpu.memory_space<vmem>>, vector<1x1x32xf32>
    %148 = vector.shape_cast %147 : vector<1x1x32xf32> to vector<1x32xf32>
    %149 = vector.broadcast %148 : vector<1x32xf32> to vector<16x32xf32>
    %150 = arith.addf %146, %149 : vector<16x32xf32>
    %151 = arith.addf %121, %150 : vector<16x32xf32>
    %c0_63 = arith.constant 0 : index
    %c0_64 = arith.constant 0 : index
    %c0_65 = arith.constant 0 : index
    %152 = vector.load %arg17[%c0_63, %c0_64, %c0_65] : memref<2x1x32xf32, #tpu.memory_space<vmem>>, vector<1x1x32xf32>
    %153 = vector.shape_cast %152 : vector<1x1x32xf32> to vector<1x32xf32>
    %c0_66 = arith.constant 0 : index
    %c0_67 = arith.constant 0 : index
    %c0_68 = arith.constant 0 : index
    %154 = vector.load %arg18[%c0_66, %c0_67, %c0_68] : memref<2x1x32xf32, #tpu.memory_space<vmem>>, vector<1x1x32xf32>
    %155 = vector.shape_cast %154 : vector<1x1x32xf32> to vector<1x32xf32>
    %cst_69 = arith.constant dense<0.000000e+00> : vector<16xf32>
    %156 = vector.multi_reduction <add>, %151, %cst_69 [1] : vector<16x32xf32> to vector<16xf32>
    %157 = vector.shape_cast %156 : vector<16xf32> to vector<16x1xf32>
    %cst_70 = arith.constant 3.200000e+01 : f32
    %158 = vector.broadcast %cst_70 : f32 to vector<16x1xf32>
    %159 = arith.divf %157, %158 : vector<16x1xf32>
    %160 = vector.broadcast %159 : vector<16x1xf32> to vector<16x32xf32>
    %161 = arith.subf %151, %160 : vector<16x32xf32>
    %162 = arith.mulf %161, %161 : vector<16x32xf32>
    %cst_71 = arith.constant dense<0.000000e+00> : vector<16xf32>
    %163 = vector.multi_reduction <add>, %162, %cst_71 [1] : vector<16x32xf32> to vector<16xf32>
    %164 = vector.shape_cast %163 : vector<16xf32> to vector<16x1xf32>
    %cst_72 = arith.constant 3.200000e+01 : f32
    %165 = vector.broadcast %cst_72 : f32 to vector<16x1xf32>
    %166 = arith.divf %164, %165 : vector<16x1xf32>
    %167 = vector.broadcast %159 : vector<16x1xf32> to vector<16x32xf32>
    %168 = arith.subf %151, %167 : vector<16x32xf32>
    %cst_73 = arith.constant 9.99999996E-13 : f32
    %169 = vector.broadcast %cst_73 : f32 to vector<16x1xf32>
    %170 = arith.addf %166, %169 : vector<16x1xf32>
    %171 = math.rsqrt %170 : vector<16x1xf32>
    %172 = vector.broadcast %171 : vector<16x1xf32> to vector<16x32xf32>
    %173 = arith.mulf %168, %172 : vector<16x32xf32>
    %174 = vector.broadcast %153 : vector<1x32xf32> to vector<16x32xf32>
    %175 = arith.mulf %173, %174 : vector<16x32xf32>
    %176 = vector.broadcast %155 : vector<1x32xf32> to vector<16x32xf32>
    %177 = arith.addf %175, %176 : vector<16x32xf32>
    %c1 = arith.constant 1 : index
    %c0_74 = arith.constant 0 : index
    %c0_75 = arith.constant 0 : index
    %178 = vector.load %arg7[%c1, %c0_74, %c0_75] : memref<2x32x96xbf16, #tpu.memory_space<vmem>>, vector<1x32x96xbf16>
    %179 = vector.shape_cast %178 : vector<1x32x96xbf16> to vector<32x96xbf16>
    %180 = arith.truncf %177 : vector<16x32xf32> to vector<16x32xbf16>
    %cst_76 = arith.constant dense<0.000000e+00> : vector<16x96xf32>
    %181 = tpu.matmul %180, %179, %cst_76 {dimension_numbers = #tpu.dot_dimension_numbers<[1], [0], [0], [1], [0, 0, 1, 1], [], []>} : vector<16x32xbf16>, vector<32x96xbf16>, vector<16x96xf32> -> vector<16x96xf32>
    %c1_77 = arith.constant 1 : index
    %c0_78 = arith.constant 0 : index
    %c0_79 = arith.constant 0 : index
    %182 = vector.load %arg8[%c1_77, %c0_78, %c0_79] : memref<2x1x96xf32, #tpu.memory_space<vmem>>, vector<1x1x96xf32>
    %183 = vector.shape_cast %182 : vector<1x1x96xf32> to vector<1x96xf32>
    %184 = vector.broadcast %183 : vector<1x96xf32> to vector<16x96xf32>
    %185 = arith.addf %181, %184 : vector<16x96xf32>
    %186 = vector.extract_strided_slice %185 {offsets = [0, 0], sizes = [16, 32], strides = [1, 1]} : vector<16x96xf32> to vector<16x32xf32>
    %187 = vector.extract_strided_slice %186 {offsets = [0, 0], sizes = [8, 16], strides = [1, 1]} : vector<16x32xf32> to vector<8x16xf32>
    %188 = vector.extract_strided_slice %186 {offsets = [0, 16], sizes = [8, 16], strides = [1, 1]} : vector<16x32xf32> to vector<8x16xf32>
    %189 = vector.extract_strided_slice %186 {offsets = [8, 0], sizes = [8, 16], strides = [1, 1]} : vector<16x32xf32> to vector<8x16xf32>
    %190 = vector.extract_strided_slice %186 {offsets = [8, 16], sizes = [8, 16], strides = [1, 1]} : vector<16x32xf32> to vector<8x16xf32>
    %191 = tpu.concatenate %187, %188, %189, %190 in 0 : vector<8x16xf32>, vector<8x16xf32>, vector<8x16xf32>, vector<8x16xf32> -> vector<32x16xf32>
    %192 = vector.extract_strided_slice %185 {offsets = [0, 32], sizes = [16, 32], strides = [1, 1]} : vector<16x96xf32> to vector<16x32xf32>
    %193 = vector.extract_strided_slice %192 {offsets = [0, 0], sizes = [8, 16], strides = [1, 1]} : vector<16x32xf32> to vector<8x16xf32>
    %194 = vector.extract_strided_slice %192 {offsets = [0, 16], sizes = [8, 16], strides = [1, 1]} : vector<16x32xf32> to vector<8x16xf32>
    %195 = vector.extract_strided_slice %192 {offsets = [8, 0], sizes = [8, 16], strides = [1, 1]} : vector<16x32xf32> to vector<8x16xf32>
    %196 = vector.extract_strided_slice %192 {offsets = [8, 16], sizes = [8, 16], strides = [1, 1]} : vector<16x32xf32> to vector<8x16xf32>
    %197 = tpu.concatenate %193, %194, %195, %196 in 0 : vector<8x16xf32>, vector<8x16xf32>, vector<8x16xf32>, vector<8x16xf32> -> vector<32x16xf32>
    %198 = vector.extract_strided_slice %185 {offsets = [0, 64], sizes = [16, 32], strides = [1, 1]} : vector<16x96xf32> to vector<16x32xf32>
    %199 = vector.extract_strided_slice %198 {offsets = [0, 0], sizes = [8, 16], strides = [1, 1]} : vector<16x32xf32> to vector<8x16xf32>
    %200 = vector.extract_strided_slice %198 {offsets = [0, 16], sizes = [8, 16], strides = [1, 1]} : vector<16x32xf32> to vector<8x16xf32>
    %201 = vector.extract_strided_slice %198 {offsets = [8, 0], sizes = [8, 16], strides = [1, 1]} : vector<16x32xf32> to vector<8x16xf32>
    %202 = vector.extract_strided_slice %198 {offsets = [8, 16], sizes = [8, 16], strides = [1, 1]} : vector<16x32xf32> to vector<8x16xf32>
    %203 = tpu.concatenate %199, %200, %201, %202 in 0 : vector<8x16xf32>, vector<8x16xf32>, vector<8x16xf32>, vector<8x16xf32> -> vector<32x16xf32>
    %204 = tpu.transpose %197, [1, 0] : vector<32x16xf32> -> vector<16x32xf32>
    %205 = arith.truncf %191 : vector<32x16xf32> to vector<32x16xbf16>
    %206 = arith.truncf %204 : vector<16x32xf32> to vector<16x32xbf16>
    %cst_80 = arith.constant dense<0.000000e+00> : vector<32x32xf32>
    %207 = tpu.matmul %205, %206, %cst_80 {dimension_numbers = #tpu.dot_dimension_numbers<[1], [0], [0], [1], [0, 0, 1, 1], [], []>} : vector<32x16xbf16>, vector<16x32xbf16>, vector<32x32xf32> -> vector<32x32xf32>
    %208 = arith.addf %207, %35 : vector<32x32xf32>
    %cst_81 = arith.constant dense<0xFF800000> : vector<32xf32>
    %209 = vector.multi_reduction <maximumf>, %208, %cst_81 [1] : vector<32x32xf32> to vector<32xf32>
    %210 = vector.shape_cast %209 : vector<32xf32> to vector<32x1xf32>
    %211 = vector.broadcast %210 : vector<32x1xf32> to vector<32x32xf32>
    %212 = arith.subf %208, %211 : vector<32x32xf32>
    %213 = math.exp %212 : vector<32x32xf32>
    %cst_82 = arith.constant dense<0.000000e+00> : vector<32xf32>
    %214 = vector.multi_reduction <add>, %213, %cst_82 [1] : vector<32x32xf32> to vector<32xf32>
    %215 = vector.shape_cast %214 : vector<32xf32> to vector<32x1xf32>
    %216 = tpu.reciprocal %215 {approx = true} : vector<32x1xf32> -> vector<32x1xf32>
    %217 = vector.broadcast %216 : vector<32x1xf32> to vector<32x32xf32>
    %218 = arith.mulf %213, %217 : vector<32x32xf32>
    %219 = arith.truncf %218 : vector<32x32xf32> to vector<32x32xbf16>
    %220 = arith.truncf %203 : vector<32x16xf32> to vector<32x16xbf16>
    %cst_83 = arith.constant dense<0.000000e+00> : vector<32x16xf32>
    %221 = tpu.matmul %219, %220, %cst_83 {dimension_numbers = #tpu.dot_dimension_numbers<[1], [0], [0], [1], [0, 0, 1, 1], [], []>} : vector<32x32xbf16>, vector<32x16xbf16>, vector<32x16xf32> -> vector<32x16xf32>
    %222 = vector.extract_strided_slice %221 {offsets = [0, 0], sizes = [8, 16], strides = [1, 1]} : vector<32x16xf32> to vector<8x16xf32>
    %223 = vector.extract_strided_slice %221 {offsets = [8, 0], sizes = [8, 16], strides = [1, 1]} : vector<32x16xf32> to vector<8x16xf32>
    %224 = tpu.concatenate %222, %223 in 1 : vector<8x16xf32>, vector<8x16xf32> -> vector<8x32xf32>
    %225 = vector.extract_strided_slice %221 {offsets = [16, 0], sizes = [8, 16], strides = [1, 1]} : vector<32x16xf32> to vector<8x16xf32>
    %226 = vector.extract_strided_slice %221 {offsets = [24, 0], sizes = [8, 16], strides = [1, 1]} : vector<32x16xf32> to vector<8x16xf32>
    %227 = tpu.concatenate %225, %226 in 1 : vector<8x16xf32>, vector<8x16xf32> -> vector<8x32xf32>
    %228 = tpu.concatenate %224, %227 in 0 : vector<8x32xf32>, vector<8x32xf32> -> vector<16x32xf32>
    %c1_84 = arith.constant 1 : index
    %c0_85 = arith.constant 0 : index
    %c0_86 = arith.constant 0 : index
    %229 = vector.load %arg9[%c1_84, %c0_85, %c0_86] : memref<2x32x32xbf16, #tpu.memory_space<vmem>>, vector<1x32x32xbf16>
    %230 = vector.shape_cast %229 : vector<1x32x32xbf16> to vector<32x32xbf16>
    %231 = arith.truncf %228 : vector<16x32xf32> to vector<16x32xbf16>
    %cst_87 = arith.constant dense<0.000000e+00> : vector<16x32xf32>
    %232 = tpu.matmul %231, %230, %cst_87 {dimension_numbers = #tpu.dot_dimension_numbers<[1], [0], [0], [1], [0, 0, 1, 1], [], []>} : vector<16x32xbf16>, vector<32x32xbf16>, vector<16x32xf32> -> vector<16x32xf32>
    %c1_88 = arith.constant 1 : index
    %c0_89 = arith.constant 0 : index
    %c0_90 = arith.constant 0 : index
    %233 = vector.load %arg10[%c1_88, %c0_89, %c0_90] : memref<2x1x32xf32, #tpu.memory_space<vmem>>, vector<1x1x32xf32>
    %234 = vector.shape_cast %233 : vector<1x1x32xf32> to vector<1x32xf32>
    %235 = vector.broadcast %234 : vector<1x32xf32> to vector<16x32xf32>
    %236 = arith.addf %232, %235 : vector<16x32xf32>
    %237 = arith.addf %177, %236 : vector<16x32xf32>
    %c1_91 = arith.constant 1 : index
    %c0_92 = arith.constant 0 : index
    %c0_93 = arith.constant 0 : index
    %238 = vector.load %arg11[%c1_91, %c0_92, %c0_93] : memref<2x1x32xf32, #tpu.memory_space<vmem>>, vector<1x1x32xf32>
    %239 = vector.shape_cast %238 : vector<1x1x32xf32> to vector<1x32xf32>
    %c1_94 = arith.constant 1 : index
    %c0_95 = arith.constant 0 : index
    %c0_96 = arith.constant 0 : index
    %240 = vector.load %arg12[%c1_94, %c0_95, %c0_96] : memref<2x1x32xf32, #tpu.memory_space<vmem>>, vector<1x1x32xf32>
    %241 = vector.shape_cast %240 : vector<1x1x32xf32> to vector<1x32xf32>
    %cst_97 = arith.constant dense<0.000000e+00> : vector<16xf32>
    %242 = vector.multi_reduction <add>, %237, %cst_97 [1] : vector<16x32xf32> to vector<16xf32>
    %243 = vector.shape_cast %242 : vector<16xf32> to vector<16x1xf32>
    %cst_98 = arith.constant 3.200000e+01 : f32
    %244 = vector.broadcast %cst_98 : f32 to vector<16x1xf32>
    %245 = arith.divf %243, %244 : vector<16x1xf32>
    %246 = vector.broadcast %245 : vector<16x1xf32> to vector<16x32xf32>
    %247 = arith.subf %237, %246 : vector<16x32xf32>
    %248 = arith.mulf %247, %247 : vector<16x32xf32>
    %cst_99 = arith.constant dense<0.000000e+00> : vector<16xf32>
    %249 = vector.multi_reduction <add>, %248, %cst_99 [1] : vector<16x32xf32> to vector<16xf32>
    %250 = vector.shape_cast %249 : vector<16xf32> to vector<16x1xf32>
    %cst_100 = arith.constant 3.200000e+01 : f32
    %251 = vector.broadcast %cst_100 : f32 to vector<16x1xf32>
    %252 = arith.divf %250, %251 : vector<16x1xf32>
    %253 = vector.broadcast %245 : vector<16x1xf32> to vector<16x32xf32>
    %254 = arith.subf %237, %253 : vector<16x32xf32>
    %cst_101 = arith.constant 9.99999996E-13 : f32
    %255 = vector.broadcast %cst_101 : f32 to vector<16x1xf32>
    %256 = arith.addf %252, %255 : vector<16x1xf32>
    %257 = math.rsqrt %256 : vector<16x1xf32>
    %258 = vector.broadcast %257 : vector<16x1xf32> to vector<16x32xf32>
    %259 = arith.mulf %254, %258 : vector<16x32xf32>
    %260 = vector.broadcast %239 : vector<1x32xf32> to vector<16x32xf32>
    %261 = arith.mulf %259, %260 : vector<16x32xf32>
    %262 = vector.broadcast %241 : vector<1x32xf32> to vector<16x32xf32>
    %263 = arith.addf %261, %262 : vector<16x32xf32>
    %c1_102 = arith.constant 1 : index
    %c0_103 = arith.constant 0 : index
    %c0_104 = arith.constant 0 : index
    %264 = vector.load %arg13[%c1_102, %c0_103, %c0_104] : memref<2x32x64xbf16, #tpu.memory_space<vmem>>, vector<1x32x64xbf16>
    %265 = vector.shape_cast %264 : vector<1x32x64xbf16> to vector<32x64xbf16>
    %266 = arith.truncf %263 : vector<16x32xf32> to vector<16x32xbf16>
    %cst_105 = arith.constant dense<0.000000e+00> : vector<16x64xf32>
    %267 = tpu.matmul %266, %265, %cst_105 {dimension_numbers = #tpu.dot_dimension_numbers<[1], [0], [0], [1], [0, 0, 1, 1], [], []>} : vector<16x32xbf16>, vector<32x64xbf16>, vector<16x64xf32> -> vector<16x64xf32>
    %c1_106 = arith.constant 1 : index
    %c0_107 = arith.constant 0 : index
    %c0_108 = arith.constant 0 : index
    %268 = vector.load %arg14[%c1_106, %c0_107, %c0_108] : memref<2x1x64xf32, #tpu.memory_space<vmem>>, vector<1x1x64xf32>
    %269 = vector.shape_cast %268 : vector<1x1x64xf32> to vector<1x64xf32>
    %270 = vector.broadcast %269 : vector<1x64xf32> to vector<16x64xf32>
    %271 = arith.addf %267, %270 : vector<16x64xf32>
    %272 = arith.mulf %271, %271 : vector<16x64xf32>
    %273 = arith.mulf %271, %272 : vector<16x64xf32>
    %cst_109 = arith.constant 4.471500e-02 : f32
    %274 = vector.broadcast %cst_109 : f32 to vector<16x64xf32>
    %275 = arith.mulf %274, %273 : vector<16x64xf32>
    %276 = arith.addf %271, %275 : vector<16x64xf32>
    %cst_110 = arith.constant 0.797884583 : f32
    %277 = vector.broadcast %cst_110 : f32 to vector<16x64xf32>
    %278 = arith.mulf %277, %276 : vector<16x64xf32>
    %279 = math.tanh %278 : vector<16x64xf32>
    %cst_111 = arith.constant 1.000000e+00 : f32
    %280 = vector.broadcast %cst_111 : f32 to vector<16x64xf32>
    %281 = arith.addf %280, %279 : vector<16x64xf32>
    %cst_112 = arith.constant 5.000000e-01 : f32
    %282 = vector.broadcast %cst_112 : f32 to vector<16x64xf32>
    %283 = arith.mulf %282, %281 : vector<16x64xf32>
    %284 = arith.mulf %271, %283 : vector<16x64xf32>
    %c1_113 = arith.constant 1 : index
    %c0_114 = arith.constant 0 : index
    %c0_115 = arith.constant 0 : index
    %285 = vector.load %arg15[%c1_113, %c0_114, %c0_115] : memref<2x64x32xbf16, #tpu.memory_space<vmem>>, vector<1x64x32xbf16>
    %286 = vector.shape_cast %285 : vector<1x64x32xbf16> to vector<64x32xbf16>
    %287 = arith.truncf %284 : vector<16x64xf32> to vector<16x64xbf16>
    %cst_116 = arith.constant dense<0.000000e+00> : vector<16x32xf32>
    %288 = tpu.matmul %287, %286, %cst_116 {dimension_numbers = #tpu.dot_dimension_numbers<[1], [0], [0], [1], [0, 0, 1, 1], [], []>} : vector<16x64xbf16>, vector<64x32xbf16>, vector<16x32xf32> -> vector<16x32xf32>
    %c1_117 = arith.constant 1 : index
    %c0_118 = arith.constant 0 : index
    %c0_119 = arith.constant 0 : index
    %289 = vector.load %arg16[%c1_117, %c0_118, %c0_119] : memref<2x1x32xf32, #tpu.memory_space<vmem>>, vector<1x1x32xf32>
    %290 = vector.shape_cast %289 : vector<1x1x32xf32> to vector<1x32xf32>
    %291 = vector.broadcast %290 : vector<1x32xf32> to vector<16x32xf32>
    %292 = arith.addf %288, %291 : vector<16x32xf32>
    %293 = arith.addf %263, %292 : vector<16x32xf32>
    %c1_120 = arith.constant 1 : index
    %c0_121 = arith.constant 0 : index
    %c0_122 = arith.constant 0 : index
    %294 = vector.load %arg17[%c1_120, %c0_121, %c0_122] : memref<2x1x32xf32, #tpu.memory_space<vmem>>, vector<1x1x32xf32>
    %295 = vector.shape_cast %294 : vector<1x1x32xf32> to vector<1x32xf32>
    %c1_123 = arith.constant 1 : index
    %c0_124 = arith.constant 0 : index
    %c0_125 = arith.constant 0 : index
    %296 = vector.load %arg18[%c1_123, %c0_124, %c0_125] : memref<2x1x32xf32, #tpu.memory_space<vmem>>, vector<1x1x32xf32>
    %297 = vector.shape_cast %296 : vector<1x1x32xf32> to vector<1x32xf32>
    %cst_126 = arith.constant dense<0.000000e+00> : vector<16xf32>
    %298 = vector.multi_reduction <add>, %293, %cst_126 [1] : vector<16x32xf32> to vector<16xf32>
    %299 = vector.shape_cast %298 : vector<16xf32> to vector<16x1xf32>
    %cst_127 = arith.constant 3.200000e+01 : f32
    %300 = vector.broadcast %cst_127 : f32 to vector<16x1xf32>
    %301 = arith.divf %299, %300 : vector<16x1xf32>
    %302 = vector.broadcast %301 : vector<16x1xf32> to vector<16x32xf32>
    %303 = arith.subf %293, %302 : vector<16x32xf32>
    %304 = arith.mulf %303, %303 : vector<16x32xf32>
    %cst_128 = arith.constant dense<0.000000e+00> : vector<16xf32>
    %305 = vector.multi_reduction <add>, %304, %cst_128 [1] : vector<16x32xf32> to vector<16xf32>
    %306 = vector.shape_cast %305 : vector<16xf32> to vector<16x1xf32>
    %cst_129 = arith.constant 3.200000e+01 : f32
    %307 = vector.broadcast %cst_129 : f32 to vector<16x1xf32>
    %308 = arith.divf %306, %307 : vector<16x1xf32>
    %309 = vector.broadcast %301 : vector<16x1xf32> to vector<16x32xf32>
    %310 = arith.subf %293, %309 : vector<16x32xf32>
    %cst_130 = arith.constant 9.99999996E-13 : f32
    %311 = vector.broadcast %cst_130 : f32 to vector<16x1xf32>
    %312 = arith.addf %308, %311 : vector<16x1xf32>
    %313 = math.rsqrt %312 : vector<16x1xf32>
    %314 = vector.broadcast %313 : vector<16x1xf32> to vector<16x32xf32>
    %315 = arith.mulf %310, %314 : vector<16x32xf32>
    %316 = vector.broadcast %295 : vector<1x32xf32> to vector<16x32xf32>
    %317 = arith.mulf %315, %316 : vector<16x32xf32>
    %318 = vector.broadcast %297 : vector<1x32xf32> to vector<16x32xf32>
    %319 = arith.addf %317, %318 : vector<16x32xf32>
    %320 = tpu.iota {dimensions = array<i32: 0>} : vector<2x16xi32>
    %321 = tpu.iota {dimensions = array<i32: 1>} : vector<2x16xi32>
    %c8_i32 = arith.constant 8 : i32
    %322 = vector.broadcast %c8_i32 : i32 to vector<2x16xi32>
    %323 = arith.muli %320, %322 : vector<2x16xi32>
    %324 = arith.cmpi eq, %321, %323 : vector<2x16xi32>
    %325 = arith.extui %324 : vector<2x16xi1> to vector<2x16xi32>
    %326 = arith.sitofp %325 : vector<2x16xi32> to vector<2x16xf32>
    %327 = arith.truncf %326 : vector<2x16xf32> to vector<2x16xbf16>
    %328 = arith.truncf %319 : vector<16x32xf32> to vector<16x32xbf16>
    %cst_131 = arith.constant dense<0.000000e+00> : vector<2x32xf32>
    %329 = tpu.matmul %327, %328, %cst_131 {dimension_numbers = #tpu.dot_dimension_numbers<[1], [0], [0], [1], [0, 0, 1, 1], [], []>} : vector<2x16xbf16>, vector<16x32xbf16>, vector<2x32xf32> -> vector<2x32xf32>
    %c0_132 = arith.constant 0 : index
    %c0_133 = arith.constant 0 : index
    %330 = vector.load %arg19[%c0_132, %c0_133] : memref<32x32xbf16, #tpu.memory_space<vmem>>, vector<32x32xbf16>
    %331 = arith.truncf %329 : vector<2x32xf32> to vector<2x32xbf16>
    %cst_134 = arith.constant dense<0.000000e+00> : vector<2x32xf32>
    %332 = tpu.matmul %331, %330, %cst_134 {dimension_numbers = #tpu.dot_dimension_numbers<[1], [0], [0], [1], [0, 0, 1, 1], [], []>} : vector<2x32xbf16>, vector<32x32xbf16>, vector<2x32xf32> -> vector<2x32xf32>
    %c0_135 = arith.constant 0 : index
    %c0_136 = arith.constant 0 : index
    %333 = vector.load %arg20[%c0_135, %c0_136] : memref<1x32xf32, #tpu.memory_space<vmem>>, vector<1x32xf32>
    %334 = vector.broadcast %333 : vector<1x32xf32> to vector<2x32xf32>
    %335 = arith.addf %332, %334 : vector<2x32xf32>
    %336 = math.tanh %335 : vector<2x32xf32>
    %c0_137 = arith.constant 0 : index
    %c0_138 = arith.constant 0 : index
    %337 = vector.load %arg21[%c0_137, %c0_138] : memref<32x128xbf16, #tpu.memory_space<vmem>>, vector<32x128xbf16>
    %338 = arith.truncf %336 : vector<2x32xf32> to vector<2x32xbf16>
    %cst_139 = arith.constant dense<0.000000e+00> : vector<2x128xf32>
    %339 = tpu.matmul %338, %337, %cst_139 {dimension_numbers = #tpu.dot_dimension_numbers<[1], [0], [0], [1], [0, 0, 1, 1], [], []>} : vector<2x32xbf16>, vector<32x128xbf16>, vector<2x128xf32> -> vector<2x128xf32>
    %c0_140 = arith.constant 0 : index
    %c0_141 = arith.constant 0 : index
    %340 = vector.load %arg22[%c0_140, %c0_141] : memref<1x128xf32, #tpu.memory_space<vmem>>, vector<1x128xf32>
    %341 = vector.broadcast %340 : vector<1x128xf32> to vector<2x128xf32>
    %342 = arith.addf %339, %341 : vector<2x128xf32>
    %c0_142 = arith.constant 0 : index
    %c0_143 = arith.constant 0 : index
    %343 = vector.load %arg2[%c0_142, %c0_143] : memref<2x16xf32, #tpu.memory_space<vmem>>, vector<2x16xf32>
    %c0_144 = arith.constant 0 : index
    %c0_145 = arith.constant 0 : index
    %344 = vector.load %arg23[%c0_144, %c0_145] : memref<16x32xbf16, #tpu.memory_space<vmem>>, vector<16x32xbf16>
    %345 = arith.truncf %343 : vector<2x16xf32> to vector<2x16xbf16>
    %cst_146 = arith.constant dense<0.000000e+00> : vector<2x32xf32>
    %346 = tpu.matmul %345, %344, %cst_146 {dimension_numbers = #tpu.dot_dimension_numbers<[1], [0], [0], [1], [0, 0, 1, 1], [], []>} : vector<2x16xbf16>, vector<16x32xbf16>, vector<2x32xf32> -> vector<2x32xf32>
    %c0_147 = arith.constant 0 : index
    %c0_148 = arith.constant 0 : index
    %347 = vector.load %arg24[%c0_147, %c0_148] : memref<1x32xf32, #tpu.memory_space<vmem>>, vector<1x32xf32>
    %348 = vector.broadcast %347 : vector<1x32xf32> to vector<2x32xf32>
    %349 = arith.addf %346, %348 : vector<2x32xf32>
    %c0_149 = arith.constant 0 : index
    %c0_150 = arith.constant 0 : index
    %350 = vector.load %arg25[%c0_149, %c0_150] : memref<128x4xbf16, #tpu.memory_space<vmem>>, vector<128x4xbf16>
    %351 = arith.truncf %342 : vector<2x128xf32> to vector<2x128xbf16>
    %cst_151 = arith.constant dense<0.000000e+00> : vector<2x4xf32>
    %352 = tpu.matmul %351, %350, %cst_151 {dimension_numbers = #tpu.dot_dimension_numbers<[1], [0], [0], [1], [0, 0, 1, 1], [], []>} : vector<2x128xbf16>, vector<128x4xbf16>, vector<2x4xf32> -> vector<2x4xf32>
    %c0_152 = arith.constant 0 : index
    %c0_153 = arith.constant 0 : index
    %353 = vector.load %arg26[%c0_152, %c0_153] : memref<32x4xbf16, #tpu.memory_space<vmem>>, vector<32x4xbf16>
    %354 = arith.truncf %349 : vector<2x32xf32> to vector<2x32xbf16>
    %cst_154 = arith.constant dense<0.000000e+00> : vector<2x4xf32>
    %355 = tpu.matmul %354, %353, %cst_154 {dimension_numbers = #tpu.dot_dimension_numbers<[1], [0], [0], [1], [0, 0, 1, 1], [], []>} : vector<2x32xbf16>, vector<32x4xbf16>, vector<2x4xf32> -> vector<2x4xf32>
    %356 = arith.addf %352, %355 : vector<2x4xf32>
    %c0_155 = arith.constant 0 : index
    %c0_156 = arith.constant 0 : index
    %357 = vector.load %arg27[%c0_155, %c0_156] : memref<1x4xf32, #tpu.memory_space<vmem>>, vector<1x4xf32>
    %358 = vector.broadcast %357 : vector<1x4xf32> to vector<2x4xf32>
    %359 = arith.addf %356, %358 : vector<2x4xf32>
    %c0_157 = arith.constant 0 : index
    %c0_158 = arith.constant 0 : index
    %360 = vector.load %arg28[%c0_157, %c0_158] : memref<2x4xf32, #tpu.memory_space<vmem>>, vector<2x4xf32>
    tpu.vector_store %arg28[%c0_157, %c0_158], %359 {strides = array<i32>} : memref<2x4xf32, #tpu.memory_space<vmem>>, vector<2x4xf32>,
    return
  }
}

</mosaic_0001>

<llo_original>
// kernel: bert_with_emoji_forward.1
$region0: #{bert_with_emoji_forward.1}
  #allocation0 [shape = 'u32[]', space=smem, size = 0x4, offset = 0x4, fixed_abs, tag = 'smem constant byte address 0x4 - core index']
  #allocation1 [shape = 'u32[144,128]{1,0:T(1,128)}', space=vmem, size = 0x12000, scoped, tag = 'internal scratch']
  %s0 = inlined_call_operand.vmem [shape: s32[16,1], index: 0, kind: input, shape index: {}]
  %s1 = inlined_call_operand.vmem [shape: f32[32,32], index: 1, kind: input, shape index: {}]
  %s2 = inlined_call_operand.vmem [shape: f32[2,16], index: 2, kind: input, shape index: {}]
  %s3 = inlined_call_operand.vmem [shape: bf16[128,32], index: 3, kind: input, shape index: {}]
  %s4 = inlined_call_operand.vmem [shape: f32[16,32], index: 4, kind: input, shape index: {}]
  %s5 = inlined_call_operand.vmem [shape: f32[1,32], index: 5, kind: input, shape index: {}]
  %s6 = inlined_call_operand.vmem [shape: f32[1,32], index: 6, kind: input, shape index: {}]
  %s7 = inlined_call_operand.vmem [shape: bf16[2,32,96], index: 7, kind: input, shape index: {}]
  %s8 = inlined_call_operand.vmem [shape: f32[2,1,96], index: 8, kind: input, shape index: {}]
  %s9 = inlined_call_operand.vmem [shape: bf16[2,32,32], index: 9, kind: input, shape index: {}]
  %s10 = inlined_call_operand.vmem [shape: f32[2,1,32], index: 10, kind: input, shape index: {}]
  %s11 = inlined_call_operand.vmem [shape: f32[2,1,32], index: 11, kind: input, shape index: {}]
  %s12 = inlined_call_operand.vmem [shape: f32[2,1,32], index: 12, kind: input, shape index: {}]
  %s13 = inlined_call_operand.vmem [shape: bf16[2,32,64], index: 13, kind: input, shape index: {}]
  %s14 = inlined_call_operand.vmem [shape: f32[2,1,64], index: 14, kind: input, shape index: {}]
  %s15 = inlined_call_operand.vmem [shape: bf16[2,64,32], index: 15, kind: input, shape index: {}]
  %s16 = inlined_call_operand.vmem [shape: f32[2,1,32], index: 16, kind: input, shape index: {}]
  %s17 = inlined_call_operand.vmem [shape: f32[2,1,32], index: 17, kind: input, shape index: {}]
  %s18 = inlined_call_operand.vmem [shape: f32[2,1,32], index: 18, kind: input, shape index: {}]
  %s19 = inlined_call_operand.vmem [shape: bf16[32,32], index: 19, kind: input, shape index: {}]
  %s20 = inlined_call_operand.vmem [shape: f32[1,32], index: 20, kind: input, shape index: {}]
  %s21 = inlined_call_operand.vmem [shape: bf16[32,128], index: 21, kind: input, shape index: {}]
  %s22 = inlined_call_operand.vmem [shape: f32[1,128], index: 22, kind: input, shape index: {}]
  %s23 = inlined_call_operand.vmem [shape: bf16[16,32], index: 23, kind: input, shape index: {}]
  %s24 = inlined_call_operand.vmem [shape: f32[1,32], index: 24, kind: input, shape index: {}]
  %s25 = inlined_call_operand.vmem [shape: bf16[128,4], index: 25, kind: input, shape index: {}]
  %s26 = inlined_call_operand.vmem [shape: bf16[32,4], index: 26, kind: input, shape index: {}]
  %s27 = inlined_call_operand.vmem [shape: f32[1,4], index: 27, kind: input, shape index: {}]
  %s28 = inlined_call_operand.hbm [shape: f32[2,4], index: 28, kind: output, shape index: {}]
  %s29 = sld [smem:[#allocation0]]
  $region122: #{bert_with_emoji_forward.1} parent=0
    _
  %s31 = ssub.s32 1, %s29
  %s32 = scalar_select 0, %s31, %s29
  $region1: #{bert_with_emoji_forward.1} parent=0
    #allocation2 [shape = 'u8[1024]{0}', space=vmem, size = 0x400, scoped, tag = 'output window, operand 0, single buffered']
    #allocation3 [shape = 's32[1]{0}', space=sflag, size = 0x4, scoped, tag = 'scoped memory for bert_with_emoji_forward.1']
    %33 = vsyncpa [#allocation3], 0
    // Predicated region
    $region2: #{bert_with_emoji_forward.1} parent=1 // pred_check
      _
    $region3: #{bert_with_emoji_forward.1} parent=1 // pred_check_branch
      %35 = sbr.rel (0) target = $region5
    $region4: #{bert_with_emoji_forward.1} parent=1 // pred_region
      _
    $region5: #{bert_with_emoji_forward.1} parent=1 // pred_fallthru
      _
    // Predicated region
    $region6: #{bert_with_emoji_forward.1} parent=1 // pred_check
      _
    $region7: #{bert_with_emoji_forward.1} parent=1 // pred_check_branch
      %37 = sbr.rel (0) target = $region9
    $region8: #{bert_with_emoji_forward.1} parent=1 // pred_region
      _
    $region9: #{bert_with_emoji_forward.1} parent=1 // pred_fallthru
      _
    // Predicated region
    $region10: #{bert_with_emoji_forward.1} parent=1 // pred_check
      _
    $region11: #{bert_with_emoji_forward.1} parent=1 // pred_check_branch
      %39 = sbr.rel (0) target = $region13
    $region12: #{bert_with_emoji_forward.1} parent=1 // pred_region
      _
    $region13: #{bert_with_emoji_forward.1} parent=1 // pred_fallthru
      _
    // Predicated region
    $region14: #{bert_with_emoji_forward.1} parent=1 // pred_check
      _
    $region15: #{bert_with_emoji_forward.1} parent=1 // pred_check_branch
      %41 = sbr.rel (0) target = $region17
    $region16: #{bert_with_emoji_forward.1} parent=1 // pred_region
      _
    $region17: #{bert_with_emoji_forward.1} parent=1 // pred_fallthru
      _
    // Predicated region
    $region18: #{bert_with_emoji_forward.1} parent=1 // pred_check
      _
    $region19: #{bert_with_emoji_forward.1} parent=1 // pred_check_branch
      %43 = sbr.rel (0) target = $region21
    $region20: #{bert_with_emoji_forward.1} parent=1 // pred_region
      _
    $region21: #{bert_with_emoji_forward.1} parent=1 // pred_fallthru
      _
    // Predicated region
    $region22: #{bert_with_emoji_forward.1} parent=1 // pred_check
      _
    $region23: #{bert_with_emoji_forward.1} parent=1 // pred_check_branch
      %45 = sbr.rel (0) target = $region25
    $region24: #{bert_with_emoji_forward.1} parent=1 // pred_region
      _
    $region25: #{bert_with_emoji_forward.1} parent=1 // pred_fallthru
      _
    // Predicated region
    $region26: #{bert_with_emoji_forward.1} parent=1 // pred_check
      _
    $region27: #{bert_with_emoji_forward.1} parent=1 // pred_check_branch
      %47 = sbr.rel (0) target = $region29
    $region28: #{bert_with_emoji_forward.1} parent=1 // pred_region
      _
    $region29: #{bert_with_emoji_forward.1} parent=1 // pred_fallthru
      _
    // Predicated region
    $region30: #{bert_with_emoji_forward.1} parent=1 // pred_check
      _
    $region31: #{bert_with_emoji_forward.1} parent=1 // pred_check_branch
      %49 = sbr.rel (0) target = $region33
    $region32: #{bert_with_emoji_forward.1} parent=1 // pred_region
      _
    $region33: #{bert_with_emoji_forward.1} parent=1 // pred_fallthru
      _
    // Predicated region
    $region34: #{bert_with_emoji_forward.1} parent=1 // pred_check
      _
    $region35: #{bert_with_emoji_forward.1} parent=1 // pred_check_branch
      %51 = sbr.rel (0) target = $region37
    $region36: #{bert_with_emoji_forward.1} parent=1 // pred_region
      _
    $region37: #{bert_with_emoji_forward.1} parent=1 // pred_fallthru
      _
    // Predicated region
    $region38: #{bert_with_emoji_forward.1} parent=1 // pred_check
      _
    $region39: #{bert_with_emoji_forward.1} parent=1 // pred_check_branch
      %53 = sbr.rel (0) target = $region41
    $region40: #{bert_with_emoji_forward.1} parent=1 // pred_region
      _
    $region41: #{bert_with_emoji_forward.1} parent=1 // pred_fallthru
      _
    // Predicated region
    $region42: #{bert_with_emoji_forward.1} parent=1 // pred_check
      _
    $region43: #{bert_with_emoji_forward.1} parent=1 // pred_check_branch
      %55 = sbr.rel (0) target = $region45
    $region44: #{bert_with_emoji_forward.1} parent=1 // pred_region
      _
    $region45: #{bert_with_emoji_forward.1} parent=1 // pred_fallthru
      _
    // Predicated region
    $region46: #{bert_with_emoji_forward.1} parent=1 // pred_check
      _
    $region47: #{bert_with_emoji_forward.1} parent=1 // pred_check_branch
      %57 = sbr.rel (0) target = $region49
    $region48: #{bert_with_emoji_forward.1} parent=1 // pred_region
      _
    $region49: #{bert_with_emoji_forward.1} parent=1 // pred_fallthru
      _
    // Predicated region
    $region50: #{bert_with_emoji_forward.1} parent=1 // pred_check
      _
    $region51: #{bert_with_emoji_forward.1} parent=1 // pred_check_branch
      %59 = sbr.rel (0) target = $region53
    $region52: #{bert_with_emoji_forward.1} parent=1 // pred_region
      _
    $region53: #{bert_with_emoji_forward.1} parent=1 // pred_fallthru
      _
    // Predicated region
    $region54: #{bert_with_emoji_forward.1} parent=1 // pred_check
      _
    $region55: #{bert_with_emoji_forward.1} parent=1 // pred_check_branch
      %61 = sbr.rel (0) target = $region57
    $region56: #{bert_with_emoji_forward.1} parent=1 // pred_region
      _
    $region57: #{bert_with_emoji_forward.1} parent=1 // pred_fallthru
      _
    // Predicated region
    $region58: #{bert_with_emoji_forward.1} parent=1 // pred_check
      _
    $region59: #{bert_with_emoji_forward.1} parent=1 // pred_check_branch
      %63 = sbr.rel (0) target = $region61
    $region60: #{bert_with_emoji_forward.1} parent=1 // pred_region
      _
    $region61: #{bert_with_emoji_forward.1} parent=1 // pred_fallthru
      _
    // Predicated region
    $region62: #{bert_with_emoji_forward.1} parent=1 // pred_check
      _
    $region63: #{bert_with_emoji_forward.1} parent=1 // pred_check_branch
      %65 = sbr.rel (0) target = $region65
    $region64: #{bert_with_emoji_forward.1} parent=1 // pred_region
      _
    $region65: #{bert_with_emoji_forward.1} parent=1 // pred_fallthru
      _
    // Predicated region
    $region66: #{bert_with_emoji_forward.1} parent=1 // pred_check
      _
    $region67: #{bert_with_emoji_forward.1} parent=1 // pred_check_branch
      %67 = sbr.rel (0) target = $region69
    $region68: #{bert_with_emoji_forward.1} parent=1 // pred_region
      _
    $region69: #{bert_with_emoji_forward.1} parent=1 // pred_fallthru
      _
    // Predicated region
    $region70: #{bert_with_emoji_forward.1} parent=1 // pred_check
      _
    $region71: #{bert_with_emoji_forward.1} parent=1 // pred_check_branch
      %69 = sbr.rel (0) target = $region73
    $region72: #{bert_with_emoji_forward.1} parent=1 // pred_region
      _
    $region73: #{bert_with_emoji_forward.1} parent=1 // pred_fallthru
      _
    // Predicated region
    $region74: #{bert_with_emoji_forward.1} parent=1 // pred_check
      _
    $region75: #{bert_with_emoji_forward.1} parent=1 // pred_check_branch
      %71 = sbr.rel (0) target = $region77
    $region76: #{bert_with_emoji_forward.1} parent=1 // pred_region
      _
    $region77: #{bert_with_emoji_forward.1} parent=1 // pred_fallthru
      _
    // Predicated region
    $region78: #{bert_with_emoji_forward.1} parent=1 // pred_check
      _
    $region79: #{bert_with_emoji_forward.1} parent=1 // pred_check_branch
      %73 = sbr.rel (0) target = $region81
    $region80: #{bert_with_emoji_forward.1} parent=1 // pred_region
      _
    $region81: #{bert_with_emoji_forward.1} parent=1 // pred_fallthru
      _
    // Predicated region
    $region82: #{bert_with_emoji_forward.1} parent=1 // pred_check
      _
    $region83: #{bert_with_emoji_forward.1} parent=1 // pred_check_branch
      %75 = sbr.rel (0) target = $region85
    $region84: #{bert_with_emoji_forward.1} parent=1 // pred_region
      _
    $region85: #{bert_with_emoji_forward.1} parent=1 // pred_fallthru
      _
    // Predicated region
    $region86: #{bert_with_emoji_forward.1} parent=1 // pred_check
      _
    $region87: #{bert_with_emoji_forward.1} parent=1 // pred_check_branch
      %77 = sbr.rel (0) target = $region89
    $region88: #{bert_with_emoji_forward.1} parent=1 // pred_region
      _
    $region89: #{bert_with_emoji_forward.1} parent=1 // pred_fallthru
      _
    // Predicated region
    $region90: #{bert_with_emoji_forward.1} parent=1 // pred_check
      _
    $region91: #{bert_with_emoji_forward.1} parent=1 // pred_check_branch
      %79 = sbr.rel (0) target = $region93
    $region92: #{bert_with_emoji_forward.1} parent=1 // pred_region
      _
    $region93: #{bert_with_emoji_forward.1} parent=1 // pred_fallthru
      _
    // Predicated region
    $region94: #{bert_with_emoji_forward.1} parent=1 // pred_check
      _
    $region95: #{bert_with_emoji_forward.1} parent=1 // pred_check_branch
      %81 = sbr.rel (0) target = $region97
    $region96: #{bert_with_emoji_forward.1} parent=1 // pred_region
      _
    $region97: #{bert_with_emoji_forward.1} parent=1 // pred_fallthru
      _
    // Predicated region
    $region98: #{bert_with_emoji_forward.1} parent=1 // pred_check
      _
    $region99: #{bert_with_emoji_forward.1} parent=1 // pred_check_branch
      %83 = sbr.rel (0) target = $region101
    $region100: #{bert_with_emoji_forward.1} parent=1 // pred_region
      _
    $region101: #{bert_with_emoji_forward.1} parent=1 // pred_fallthru
      _
    // Predicated region
    $region102: #{bert_with_emoji_forward.1} parent=1 // pred_check
      _
    $region103: #{bert_with_emoji_forward.1} parent=1 // pred_check_branch
      %85 = sbr.rel (0) target = $region105
    $region104: #{bert_with_emoji_forward.1} parent=1 // pred_region
      _
    $region105: #{bert_with_emoji_forward.1} parent=1 // pred_fallthru
      _
    // Predicated region
    $region106: #{bert_with_emoji_forward.1} parent=1 // pred_check
      _
    $region107: #{bert_with_emoji_forward.1} parent=1 // pred_check_branch
      %87 = sbr.rel (0) target = $region109
    $region108: #{bert_with_emoji_forward.1} parent=1 // pred_region
      _
    $region109: #{bert_with_emoji_forward.1} parent=1 // pred_fallthru
      _
    // Predicated region
    $region110: #{bert_with_emoji_forward.1} parent=1 // pred_check
      _
    $region111: #{bert_with_emoji_forward.1} parent=1 // pred_check_branch
      %89 = sbr.rel (0) target = $region113
    $region112: #{bert_with_emoji_forward.1} parent=1 // pred_region
      _
    $region113: #{bert_with_emoji_forward.1} parent=1 // pred_fallthru
      _
    %v91 = vld [vmem:[%s0] sm:$0xff]
    %v92 = vld [vmem:[%s0 + $0x8] sm:$0xff]
    %v93 = vlaneseq
    %v94 = vand.u32 %v93, 127
    %95 = vset.pattern.permute.xlu0 0
    %96 = vperm.xlu0 %95, %v91
    %v97 = vpop.permute.xlu0 %96
    %98 = vset.pattern.permute.xlu0 0
    %99 = vperm.xlu0 %98, %v92
    %v100 = vpop.permute.xlu0 %99
    %vm101 = vcmp.eq.s32.totalorder %v97, %v94
    %vm102 = vcmp.eq.s32.totalorder %v100, %v94
    %v103 = vsel %vm101, 1, 0
    %v104 = vsel %vm102, 1, 0
    %v105 = vcvt.s32.f32 %v103
    %v106 = vcvt.s32.f32 %v104
    %v107 = vpack.c.bf16 %v106, %v105
    %v108 = vld [vmem:[%s3] sm:$0xf]
    %v109 = vld [vmem:[%s3 + $0x4] sm:$0xf]
    %v110 = vld [vmem:[%s3 + $0x8] sm:$0xf]
    %v111 = vld [vmem:[%s3 + $0xc] sm:$0xf]
    %v112 = vld [vmem:[%s3 + $0x10] sm:$0xf]
    %v113 = vld [vmem:[%s3 + $0x14] sm:$0xf]
    %v114 = vld [vmem:[%s3 + $0x18] sm:$0xf]
    %v115 = vld [vmem:[%s3 + $0x1c] sm:$0xf]
    %v116 = vld [vmem:[%s3 + $0x20] sm:$0xf]
    %v117 = vld [vmem:[%s3 + $0x24] sm:$0xf]
    %v118 = vld [vmem:[%s3 + $0x28] sm:$0xf]
    %v119 = vld [vmem:[%s3 + $0x2c] sm:$0xf]
    %v120 = vld [vmem:[%s3 + $0x30] sm:$0xf]
    %v121 = vld [vmem:[%s3 + $0x34] sm:$0xf]
    %v122 = vld [vmem:[%s3 + $0x38] sm:$0xf]
    %v123 = vld [vmem:[%s3 + $0x3c] sm:$0xf]
    %v124 = vld [vmem:[%s4] sm:$0xff]
    %v125 = vld [vmem:[%s4 + $0x8] sm:$0xff]
    %v142 = vunpack.c.l.b16 %v108
    %v143 = vunpack.c.l.b16 %v109
    %v144 = vunpack.c.l.b16 %v110
    %v145 = vunpack.c.l.b16 %v111
    %v146 = vunpack.c.l.b16 %v112
    %v147 = vunpack.c.l.b16 %v113
    %v148 = vunpack.c.l.b16 %v114
    %v149 = vunpack.c.l.b16 %v115
    %v150 = vunpack.c.l.b16 %v116
    %v151 = vunpack.c.l.b16 %v117
    %v152 = vunpack.c.l.b16 %v118
    %v153 = vunpack.c.l.b16 %v119
    %v154 = vunpack.c.l.b16 %v120
    %v155 = vunpack.c.l.b16 %v121
    %v156 = vunpack.c.l.b16 %v122
    %v157 = vunpack.c.l.b16 %v123
    %v158 = vpack.c.b16 %v143, %v142
    %v159 = vpack.c.b16 %v145, %v144
    %v160 = vpack.c.b16 %v147, %v146
    %v161 = vpack.c.b16 %v149, %v148
    %v162 = vpack.c.b16 %v151, %v150
    %v163 = vpack.c.b16 %v153, %v152
    %v164 = vpack.c.b16 %v155, %v154
    %v165 = vpack.c.b16 %v157, %v156
    %174 = vmatprep.subr.bf16.mxu0 0
    %175 = vmatpush1.bf16.msra.mxu0 %v158
    %176 = vmatprep.subr.bf16.mxu0 0
    %177 = vmatpush1.bf16.msra.mxu0 %v159
    %178 = vmatprep.subr.bf16.mxu0 0
    %179 = vmatpush1.bf16.msra.mxu0 %v160
    %180 = vmatprep.subr.bf16.mxu0 0
    %181 = vmatpush1.bf16.msra.mxu0 %v161
    %182 = vmatprep.subr.bf16.mxu0 0
    %183 = vmatpush1.bf16.msra.mxu0 %v162
    %184 = vmatprep.subr.bf16.mxu0 0
    %185 = vmatpush1.bf16.msra.mxu0 %v163
    %186 = vmatprep.subr.bf16.mxu0 0
    %187 = vmatpush1.bf16.msra.mxu0 %v164
    %188 = vmatprep.subr.bf16.mxu0 0
    %189 = vmatpush1.bf16.msra.mxu0 %v165
    %190 = vmatprep.subr.bf16.mxu0 0
    %191 = vmatpush1.bf16.msra.mxu0 0
    %192 = vmatprep.subr.bf16.mxu0 0
    %193 = vmatpush1.bf16.msra.mxu0 0
    %194 = vmatprep.subr.bf16.mxu0 0
    %195 = vmatpush1.bf16.msra.mxu0 0
    %196 = vmatprep.subr.bf16.mxu0 0
    %197 = vmatpush1.bf16.msra.mxu0 0
    %198 = vmatprep.subr.bf16.mxu0 0
    %199 = vmatpush1.bf16.msra.mxu0 0
    %200 = vmatprep.subr.bf16.mxu0 0
    %201 = vmatpush1.bf16.msra.mxu0 0
    %202 = vmatprep.subr.bf16.mxu0 0
    %203 = vmatpush1.bf16.msra.mxu0 0
    %204 = vmatprep.subr.bf16.mxu0 0
    %205 = vmatpush1.bf16.msra.mxu0 0
    %206 = vmatprep.mubr.bf16.mxu0 0
    %207 = vmatmul.mubr.bf16.gmra.mrb[0].mxu0 %v107
    %v208 = vpop.f32.mrb[0].mxu0
    %v209 = vadd.f32 %v124, %v208
    %v210 = vpop.f32.mrb[0].mxu0
    %v211 = vpop.f32.mrb[0].mxu0
    %v212 = vadd.f32 %v125, %v211
    %v213 = vpop.f32.mrb[0].mxu0
    %214 = vdwg.mxu0
    %v215 = vld [vmem:[%s5] sm:$0x1]
    %v216 = vld [vmem:[%s6] sm:$0x1]
    %vm217 = vcmask 261120
    %v218 = vsel %vm217, %v209, 0.0
    %219 = vadd.xlane.f32.xlu0 %v218
    %v220 = vpop.xlane.xlu0 %219
    %v221 = vsel %vm217, %v212, 0.0
    %222 = vadd.xlane.f32.xlu0 %v221
    %v223 = vpop.xlane.xlu0 %222
    %v224 = vrcp.pop 32.0
    %v225 = vmul.f32 %v220, %v224
    %v226 = vmul.f32 %v223, %v224
    %v227 = vsub.f32 %v209, %v225
    %v228 = vsub.f32 %v212, %v226
    %v229 = vmul.f32 %v227, %v227
    %v230 = vmul.f32 %v228, %v228
    %v231 = vsel %vm217, %v229, 0.0
    %232 = vadd.xlane.f32.xlu0 %v231
    %v233 = vpop.xlane.xlu0 %232
    %v234 = vsel %vm217, %v230, 0.0
    %235 = vadd.xlane.f32.xlu0 %v234
    %v236 = vpop.xlane.xlu0 %235
    %v237 = vmul.f32 %v233, %v224
    %v238 = vmul.f32 %v236, %v224
    %v239 = vadd.f32 %v237, 1e-12
    %v240 = vadd.f32 %v238, 1e-12
    %v241 = vrsqrt.pop %v239
    %v242 = vrsqrt.pop %v240
    %v243 = vmul.f32 %v227, %v241
    %v244 = vmul.f32 %v228, %v242
    %v246 = vlaneseq
    %v247 = vshrl.u32 %v246, 7
    %v248 = vsub.s32 0, %v247
    %v249 = vrot.slane %v215, %v248
    %v251 = vmul.f32 %v243, %v249
    %v252 = vmul.f32 %v244, %v249
    %v254 = vlaneseq
    %v255 = vshrl.u32 %v254, 7
    %v256 = vsub.s32 0, %v255
    %v257 = vrot.slane %v216, %v256
    %v259 = vadd.f32 %v251, %v257
    %v260 = vadd.f32 %v252, %v257
    %v261 = vld [vmem:[%s1] sm:$0xff]
    %v262 = vld [vmem:[%s1 + $0x8] sm:$0xff]
    %v263 = vld [vmem:[%s1 + $0x10] sm:$0xff]
    %v264 = vld [vmem:[%s1 + $0x18] sm:$0xff]
    %v265 = vld [vmem:[%s7] sm:$0xf]
    %v266 = vld [vmem:[%s7 + $0x4] sm:$0xf]
    %v267 = vld [vmem:[%s7 + $0x8] sm:$0xf]
    %v268 = vld [vmem:[%s7 + $0xc] sm:$0xf]
    %v269 = vpack.c.bf16 %v260, %v259
    %v270 = vld [vmem:[%s8] sm:$0x1]
    %v272 = vlaneseq
    %v273 = vshrl.u32 %v272, 7
    %v274 = vsub.s32 0, %v273
    %v275 = vrot.slane %v270, %v274
    %v281 = vunpack.c.l.b16 %v265
    %v282 = vunpack.c.l.b16 %v266
    %v283 = vunpack.c.l.b16 %v267
    %v284 = vunpack.c.l.b16 %v268
    %v285 = vpack.c.b16 %v282, %v281
    %v286 = vpack.c.b16 %v284, %v283
    %v290 = vsel %vm217, %v269, 0
    %292 = vmatprep.subr.bf16.mxu0 0
    %293 = vmatpush1.bf16.msra.mxu0 %v285
    %294 = vmatprep.subr.bf16.mxu0 0
    %295 = vmatpush1.bf16.msra.mxu0 %v286
    %296 = vmatprep.subr.bf16.mxu0 0
    %297 = vmatpush1.bf16.msra.mxu0 0
    %298 = vmatprep.subr.bf16.mxu0 0
    %299 = vmatpush1.bf16.msra.mxu0 0
    %300 = vmatprep.subr.bf16.mxu0 0
    %301 = vmatpush1.bf16.msra.mxu0 0
    %302 = vmatprep.subr.bf16.mxu0 0
    %303 = vmatpush1.bf16.msra.mxu0 0
    %304 = vmatprep.subr.bf16.mxu0 0
    %305 = vmatpush1.bf16.msra.mxu0 0
    %306 = vmatprep.subr.bf16.mxu0 0
    %307 = vmatpush1.bf16.msra.mxu0 0
    %308 = vmatprep.subr.bf16.mxu0 0
    %309 = vmatpush1.bf16.msra.mxu0 0
    %310 = vmatprep.subr.bf16.mxu0 0
    %311 = vmatpush1.bf16.msra.mxu0 0
    %312 = vmatprep.subr.bf16.mxu0 0
    %313 = vmatpush1.bf16.msra.mxu0 0
    %314 = vmatprep.subr.bf16.mxu0 0
    %315 = vmatpush1.bf16.msra.mxu0 0
    %316 = vmatprep.subr.bf16.mxu0 0
    %317 = vmatpush1.bf16.msra.mxu0 0
    %318 = vmatprep.subr.bf16.mxu0 0
    %319 = vmatpush1.bf16.msra.mxu0 0
    %320 = vmatprep.subr.bf16.mxu0 0
    %321 = vmatpush1.bf16.msra.mxu0 0
    %322 = vmatprep.subr.bf16.mxu0 0
    %323 = vmatpush1.bf16.msra.mxu0 0
    %324 = vmatprep.mubr.bf16.mxu0 0
    %325 = vmatmul.mubr.bf16.gmra.mrb[0].mxu0 %v290
    %v326 = vpop.f32.mrb[0].mxu0
    %v327 = vadd.f32 %v275, %v326
    %v328 = vpop.f32.mrb[0].mxu0
    %v329 = vpop.f32.mrb[0].mxu0
    %v330 = vadd.f32 %v275, %v329
    %v331 = vpop.f32.mrb[0].mxu0
    %332 = vdwg.mxu0
    %334 = vrot.lane.b32.xlu0 %v327, 112
    %v335 = vpop.permute.xlu0 %334
    %338 = vrot.lane.b32.xlu0 %v330, 112
    %v339 = vpop.permute.xlu0 %338
    %341 = vrot.lane.b32.xlu0 %v327, 96
    %v342 = vpop.permute.xlu0 %341
    %343 = vrot.lane.b32.xlu0 %v335, 96
    %v344 = vpop.permute.xlu0 %343
    %345 = vrot.lane.b32.xlu0 %v330, 96
    %v346 = vpop.permute.xlu0 %345
    %347 = vrot.lane.b32.xlu0 %v339, 96
    %v348 = vpop.permute.xlu0 %347
    %353 = vxpose.xlu0.b32.start [1/16] %v342, 128
    %354 = vxpose.xlu0.b32.cont [2/16] %v344, 128
    %355 = vxpose.xlu0.b32.cont [3/16] %v346, 128
    %356 = vxpose.xlu0.b32.cont [4/16] %v348, 128
    %357 = vxpose.xlu0.b32.cont [5/16] 0.0, 128
    %358 = vxpose.xlu0.b32.cont [6/16] 0.0, 128
    %359 = vxpose.xlu0.b32.cont [7/16] 0.0, 128
    %360 = vxpose.xlu0.b32.cont [8/16] 0.0, 128
    %361 = vxpose.xlu0.b32.cont [9/16] 0.0, 128
    %362 = vxpose.xlu0.b32.cont [10/16] 0.0, 128
    %363 = vxpose.xlu0.b32.cont [11/16] 0.0, 128
    %364 = vxpose.xlu0.b32.cont [12/16] 0.0, 128
    %365 = vxpose.xlu0.b32.cont [13/16] 0.0, 128
    %366 = vxpose.xlu0.b32.cont [14/16] 0.0, 128
    %367 = vxpose.xlu0.b32.cont [15/16] 0.0, 128
    %368 = vxpose.xlu0.b32.end [16/16] 0.0, 128
    %v369 = vpop.trf.xlu0
    %v370 = vpop.trf.xlu0
    %v371 = vpop.trf.xlu0
    %v372 = vpop.trf.xlu0
    %v373 = vpop.trf.xlu0
    %v374 = vpop.trf.xlu0
    %v375 = vpop.trf.xlu0
    %v376 = vpop.trf.xlu0
    %v377 = vpop.trf.xlu0
    %v378 = vpop.trf.xlu0
    %v379 = vpop.trf.xlu0
    %v380 = vpop.trf.xlu0
    %v381 = vpop.trf.xlu0
    %v382 = vpop.trf.xlu0
    %v383 = vpop.trf.xlu0
    %v384 = vpop.trf.xlu0
    %v385 = vpack.c.bf16 %v335, %v327
    %v386 = vpack.c.bf16 %v339, %v330
    %v387 = vpack.c.bf16 %v370, %v369
    %vm388 = vcmask 130048
    %v390 = vsel %vm388, %v385, 0
    %v393 = vsel %vm388, %v386, 0
    %395 = vmatprep.subr.bf16.mxu0 0
    %396 = vmatpush1.bf16.msra.mxu0 %v387
    %397 = vmatprep.subr.bf16.mxu0 0
    %398 = vmatpush1.bf16.msra.mxu0 0
    %399 = vmatprep.subr.bf16.mxu0 0
    %400 = vmatpush1.bf16.msra.mxu0 0
    %401 = vmatprep.subr.bf16.mxu0 0
    %402 = vmatpush1.bf16.msra.mxu0 0
    %403 = vmatprep.subr.bf16.mxu0 0
    %404 = vmatpush1.bf16.msra.mxu0 0
    %405 = vmatprep.subr.bf16.mxu0 0
    %406 = vmatpush1.bf16.msra.mxu0 0
    %407 = vmatprep.subr.bf16.mxu0 0
    %408 = vmatpush1.bf16.msra.mxu0 0
    %409 = vmatprep.subr.bf16.mxu0 0
    %410 = vmatpush1.bf16.msra.mxu0 0
    %411 = vmatprep.subr.bf16.mxu0 0
    %412 = vmatpush1.bf16.msra.mxu0 0
    %413 = vmatprep.subr.bf16.mxu0 0
    %414 = vmatpush1.bf16.msra.mxu0 0
    %415 = vmatprep.subr.bf16.mxu0 0
    %416 = vmatpush1.bf16.msra.mxu0 0
    %417 = vmatprep.subr.bf16.mxu0 0
    %418 = vmatpush1.bf16.msra.mxu0 0
    %419 = vmatprep.subr.bf16.mxu0 0
    %420 = vmatpush1.bf16.msra.mxu0 0
    %421 = vmatprep.subr.bf16.mxu0 0
    %422 = vmatpush1.bf16.msra.mxu0 0
    %423 = vmatprep.subr.bf16.mxu0 0
    %424 = vmatpush1.bf16.msra.mxu0 0
    %425 = vmatprep.subr.bf16.mxu0 0
    %426 = vmatpush1.bf16.msra.mxu0 0
    %427 = vmatprep.mubr.bf16.mxu0 0
    %428 = vmatmul.mubr.bf16.gmra.mrb[0].mxu0 %v390
    %v429 = vpop.f32.mrb[0].mxu0
    %v430 = vadd.f32 %v261, %v429
    %v431 = vpop.f32.mrb[0].mxu0
    %v432 = vpop.f32.mrb[0].mxu0
    %v433 = vadd.f32 %v262, %v432
    %v434 = vpop.f32.mrb[0].mxu0
    %435 = vmatprep.mubr.bf16.mxu0 0
    %436 = vmatmul.mubr.bf16.gmra.mrb[0].mxu0 %v393
    %v437 = vpop.f32.mrb[0].mxu0
    %v438 = vadd.f32 %v263, %v437
    %v439 = vpop.f32.mrb[0].mxu0
    %v440 = vpop.f32.mrb[0].mxu0
    %v441 = vadd.f32 %v264, %v440
    %v442 = vpop.f32.mrb[0].mxu0
    %443 = vdwg.mxu0
    %v444 = vsel %vm217, %v430, -inf
    %445 = vmax.xlane.f32.xlu0 %v444
    %v446 = vpop.xlane.xlu0 %445
    %v447 = vsel %vm217, %v433, -inf
    %448 = vmax.xlane.f32.xlu0 %v447
    %v449 = vpop.xlane.xlu0 %448
    %v450 = vsel %vm217, %v438, -inf
    %451 = vmax.xlane.f32.xlu0 %v450
    %v452 = vpop.xlane.xlu0 %451
    %v453 = vsel %vm217, %v441, -inf
    %454 = vmax.xlane.f32.xlu0 %v453
    %v455 = vpop.xlane.xlu0 %454
    %v456 = vsub.f32 %v430, %v446
    %v457 = vsub.f32 %v433, %v449
    %v458 = vsub.f32 %v438, %v452
    %v459 = vsub.f32 %v441, %v455
    %v460 = vmul.f32 %v456, 1.442695
    %v461 = vpow.pop %v460
    %v462 = vmul.f32 %v457, 1.442695
    %v463 = vpow.pop %v462
    %v464 = vmul.f32 %v458, 1.442695
    %v465 = vpow.pop %v464
    %v466 = vmul.f32 %v459, 1.442695
    %v467 = vpow.pop %v466
    %v468 = vsel %vm217, %v461, 0.0
    %469 = vadd.xlane.f32.xlu0 %v468
    %v470 = vpop.xlane.xlu0 %469
    %v471 = vsel %vm217, %v463, 0.0
    %472 = vadd.xlane.f32.xlu0 %v471
    %v473 = vpop.xlane.xlu0 %472
    %v474 = vsel %vm217, %v465, 0.0
    %475 = vadd.xlane.f32.xlu0 %v474
    %v476 = vpop.xlane.xlu0 %475
    %v477 = vsel %vm217, %v467, 0.0
    %478 = vadd.xlane.f32.xlu0 %v477
    %v479 = vpop.xlane.xlu0 %478
    %v480 = vrcp.pop %v470
    %v481 = vrcp.pop %v473
    %v482 = vrcp.pop %v476
    %v483 = vrcp.pop %v479
    %v484 = vmul.f32 %v461, %v480
    %v485 = vmul.f32 %v463, %v481
    %v486 = vmul.f32 %v465, %v482
    %v487 = vmul.f32 %v467, %v483
    %v488 = vpack.c.bf16 %v485, %v484
    %v489 = vpack.c.bf16 %v487, %v486
    %492 = vrot.lane.b32.xlu0 %v385, 64
    %v493 = vpop.permute.xlu0 %492
    %494 = vrot.lane.b32.xlu0 %v386, 64
    %v495 = vpop.permute.xlu0 %494
    %v499 = vsel %vm217, %v488, 0
    %v502 = vsel %vm217, %v489, 0
    %504 = vmatprep.subr.bf16.mxu0 0
    %505 = vmatpush1.bf16.msra.mxu0 %v493
    %506 = vmatprep.subr.bf16.mxu0 0
    %507 = vmatpush1.bf16.msra.mxu0 %v495
    %508 = vmatprep.subr.bf16.mxu0 0
    %509 = vmatpush1.bf16.msra.mxu0 0
    %510 = vmatprep.subr.bf16.mxu0 0
    %511 = vmatpush1.bf16.msra.mxu0 0
    %512 = vmatprep.subr.bf16.mxu0 0
    %513 = vmatpush1.bf16.msra.mxu0 0
    %514 = vmatprep.subr.bf16.mxu0 0
    %515 = vmatpush1.bf16.msra.mxu0 0
    %516 = vmatprep.subr.bf16.mxu0 0
    %517 = vmatpush1.bf16.msra.mxu0 0
    %518 = vmatprep.subr.bf16.mxu0 0
    %519 = vmatpush1.bf16.msra.mxu0 0
    %520 = vmatprep.subr.bf16.mxu0 0
    %521 = vmatpush1.bf16.msra.mxu0 0
    %522 = vmatprep.subr.bf16.mxu0 0
    %523 = vmatpush1.bf16.msra.mxu0 0
    %524 = vmatprep.subr.bf16.mxu0 0
    %525 = vmatpush1.bf16.msra.mxu0 0
    %526 = vmatprep.subr.bf16.mxu0 0
    %527 = vmatpush1.bf16.msra.mxu0 0
    %528 = vmatprep.subr.bf16.mxu0 0
    %529 = vmatpush1.bf16.msra.mxu0 0
    %530 = vmatprep.subr.bf16.mxu0 0
    %531 = vmatpush1.bf16.msra.mxu0 0
    %532 = vmatprep.subr.bf16.mxu0 0
    %533 = vmatpush1.bf16.msra.mxu0 0
    %534 = vmatprep.subr.bf16.mxu0 0
    %535 = vmatpush1.bf16.msra.mxu0 0
    %536 = vmatprep.mubr.bf16.mxu0 0
    %537 = vmatmul.mubr.bf16.gmra.mrb[0].mxu0 %v499
    %v538 = vpop.f32.mrb[0].mxu0
    %v539 = vadd.f32 0.0, %v538
    %v540 = vpop.f32.mrb[0].mxu0
    %v541 = vpop.f32.mrb[0].mxu0
    %v542 = vadd.f32 0.0, %v541
    %v543 = vpop.f32.mrb[0].mxu0
    %544 = vmatprep.mubr.bf16.mxu0 0
    %545 = vmatmul.mubr.bf16.gmra.mrb[0].mxu0 %v502
    %v546 = vpop.f32.mrb[0].mxu0
    %v547 = vadd.f32 0.0, %v546
    %v548 = vpop.f32.mrb[0].mxu0
    %v549 = vpop.f32.mrb[0].mxu0
    %v550 = vadd.f32 0.0, %v549
    %v551 = vpop.f32.mrb[0].mxu0
    %552 = vdwg.mxu0
    %554 = vrot.lane.b32.xlu0 %v542, 16
    %v555 = vpop.permute.xlu0 %554
    %v557 = vsel %vm388, %v539, %v555
    %559 = vrot.lane.b32.xlu0 %v550, 16
    %v560 = vpop.permute.xlu0 %559
    %v562 = vsel %vm388, %v547, %v560
    %v563 = vld [vmem:[%s9] sm:$0xf]
    %v564 = vld [vmem:[%s9 + $0x4] sm:$0xf]
    %v565 = vld [vmem:[%s9 + $0x8] sm:$0xf]
    %v566 = vld [vmem:[%s9 + $0xc] sm:$0xf]
    %v567 = vpack.c.bf16 %v562, %v557
    %v568 = vld [vmem:[%s10] sm:$0x1]
    %v570 = vlaneseq
    %v571 = vshrl.u32 %v570, 7
    %v572 = vsub.s32 0, %v571
    %v573 = vrot.slane %v568, %v572
    %v579 = vunpack.c.l.b16 %v563
    %v580 = vunpack.c.l.b16 %v564
    %v581 = vunpack.c.l.b16 %v565
    %v582 = vunpack.c.l.b16 %v566
    %v583 = vpack.c.b16 %v580, %v579
    %v584 = vpack.c.b16 %v582, %v581
    %v588 = vsel %vm217, %v567, 0
    %590 = vmatprep.subr.bf16.mxu0 0
    %591 = vmatpush1.bf16.msra.mxu0 %v583
    %592 = vmatprep.subr.bf16.mxu0 0
    %593 = vmatpush1.bf16.msra.mxu0 %v584
    %594 = vmatprep.subr.bf16.mxu0 0
    %595 = vmatpush1.bf16.msra.mxu0 0
    %596 = vmatprep.subr.bf16.mxu0 0
    %597 = vmatpush1.bf16.msra.mxu0 0
    %598 = vmatprep.subr.bf16.mxu0 0
    %599 = vmatpush1.bf16.msra.mxu0 0
    %600 = vmatprep.subr.bf16.mxu0 0
    %601 = vmatpush1.bf16.msra.mxu0 0
    %602 = vmatprep.subr.bf16.mxu0 0
    %603 = vmatpush1.bf16.msra.mxu0 0
    %604 = vmatprep.subr.bf16.mxu0 0
    %605 = vmatpush1.bf16.msra.mxu0 0
    %606 = vmatprep.subr.bf16.mxu0 0
    %607 = vmatpush1.bf16.msra.mxu0 0
    %608 = vmatprep.subr.bf16.mxu0 0
    %609 = vmatpush1.bf16.msra.mxu0 0
    %610 = vmatprep.subr.bf16.mxu0 0
    %611 = vmatpush1.bf16.msra.mxu0 0
    %612 = vmatprep.subr.bf16.mxu0 0
    %613 = vmatpush1.bf16.msra.mxu0 0
    %614 = vmatprep.subr.bf16.mxu0 0
    %615 = vmatpush1.bf16.msra.mxu0 0
    %616 = vmatprep.subr.bf16.mxu0 0
    %617 = vmatpush1.bf16.msra.mxu0 0
    %618 = vmatprep.subr.bf16.mxu0 0
    %619 = vmatpush1.bf16.msra.mxu0 0
    %620 = vmatprep.subr.bf16.mxu0 0
    %621 = vmatpush1.bf16.msra.mxu0 0
    %622 = vmatprep.mubr.bf16.mxu0 0
    %623 = vmatmul.mubr.bf16.gmra.mrb[0].mxu0 %v588
    %v624 = vpop.f32.mrb[0].mxu0
    %v625 = vadd.f32 %v573, %v624
    %v626 = vpop.f32.mrb[0].mxu0
    %v627 = vpop.f32.mrb[0].mxu0
    %v628 = vadd.f32 %v573, %v627
    %v629 = vpop.f32.mrb[0].mxu0
    %630 = vdwg.mxu0
    %v631 = vadd.f32 %v259, %v625
    %v632 = vadd.f32 %v260, %v628
    %v633 = vld [vmem:[%s11] sm:$0x1]
    %v634 = vld [vmem:[%s12] sm:$0x1]
    %v635 = vsel %vm217, %v631, 0.0
    %636 = vadd.xlane.f32.xlu0 %v635
    %v637 = vpop.xlane.xlu0 %636
    %v638 = vsel %vm217, %v632, 0.0
    %639 = vadd.xlane.f32.xlu0 %v638
    %v640 = vpop.xlane.xlu0 %639
    %v641 = vmul.f32 %v637, %v224
    %v642 = vmul.f32 %v640, %v224
    %v643 = vsub.f32 %v631, %v641
    %v644 = vsub.f32 %v632, %v642
    %v645 = vmul.f32 %v643, %v643
    %v646 = vmul.f32 %v644, %v644
    %v647 = vsel %vm217, %v645, 0.0
    %648 = vadd.xlane.f32.xlu0 %v647
    %v649 = vpop.xlane.xlu0 %648
    %v650 = vsel %vm217, %v646, 0.0
    %651 = vadd.xlane.f32.xlu0 %v650
    %v652 = vpop.xlane.xlu0 %651
    %v653 = vmul.f32 %v649, %v224
    %v654 = vmul.f32 %v652, %v224
    %v655 = vadd.f32 %v653, 1e-12
    %v656 = vadd.f32 %v654, 1e-12
    %v657 = vrsqrt.pop %v655
    %v658 = vrsqrt.pop %v656
    %v659 = vmul.f32 %v643, %v657
    %v660 = vmul.f32 %v644, %v658
    %v662 = vlaneseq
    %v663 = vshrl.u32 %v662, 7
    %v664 = vsub.s32 0, %v663
    %v665 = vrot.slane %v633, %v664
    %v667 = vmul.f32 %v659, %v665
    %v668 = vmul.f32 %v660, %v665
    %v670 = vlaneseq
    %v671 = vshrl.u32 %v670, 7
    %v672 = vsub.s32 0, %v671
    %v673 = vrot.slane %v634, %v672
    %v675 = vadd.f32 %v667, %v673
    %v676 = vadd.f32 %v668, %v673
    %v677 = vld [vmem:[%s13] sm:$0xf]
    %v678 = vld [vmem:[%s13 + $0x4] sm:$0xf]
    %v679 = vld [vmem:[%s13 + $0x8] sm:$0xf]
    %v680 = vld [vmem:[%s13 + $0xc] sm:$0xf]
    %v681 = vpack.c.bf16 %v676, %v675
    %v682 = vld [vmem:[%s14] sm:$0x1]
    %v684 = vlaneseq
    %v685 = vshrl.u32 %v684, 7
    %v686 = vsub.s32 0, %v685
    %v687 = vrot.slane %v682, %v686
    %v693 = vunpack.c.l.b16 %v677
    %v694 = vunpack.c.l.b16 %v678
    %v695 = vunpack.c.l.b16 %v679
    %v696 = vunpack.c.l.b16 %v680
    %v697 = vpack.c.b16 %v694, %v693
    %v698 = vpack.c.b16 %v696, %v695
    %v702 = vsel %vm217, %v681, 0
    %704 = vmatprep.subr.bf16.mxu0 0
    %705 = vmatpush1.bf16.msra.mxu0 %v697
    %706 = vmatprep.subr.bf16.mxu0 0
    %707 = vmatpush1.bf16.msra.mxu0 %v698
    %708 = vmatprep.subr.bf16.mxu0 0
    %709 = vmatpush1.bf16.msra.mxu0 0
    %710 = vmatprep.subr.bf16.mxu0 0
    %711 = vmatpush1.bf16.msra.mxu0 0
    %712 = vmatprep.subr.bf16.mxu0 0
    %713 = vmatpush1.bf16.msra.mxu0 0
    %714 = vmatprep.subr.bf16.mxu0 0
    %715 = vmatpush1.bf16.msra.mxu0 0
    %716 = vmatprep.subr.bf16.mxu0 0
    %717 = vmatpush1.bf16.msra.mxu0 0
    %718 = vmatprep.subr.bf16.mxu0 0
    %719 = vmatpush1.bf16.msra.mxu0 0
    %720 = vmatprep.subr.bf16.mxu0 0
    %721 = vmatpush1.bf16.msra.mxu0 0
    %722 = vmatprep.subr.bf16.mxu0 0
    %723 = vmatpush1.bf16.msra.mxu0 0
    %724 = vmatprep.subr.bf16.mxu0 0
    %725 = vmatpush1.bf16.msra.mxu0 0
    %726 = vmatprep.subr.bf16.mxu0 0
    %727 = vmatpush1.bf16.msra.mxu0 0
    %728 = vmatprep.subr.bf16.mxu0 0
    %729 = vmatpush1.bf16.msra.mxu0 0
    %730 = vmatprep.subr.bf16.mxu0 0
    %731 = vmatpush1.bf16.msra.mxu0 0
    %732 = vmatprep.subr.bf16.mxu0 0
    %733 = vmatpush1.bf16.msra.mxu0 0
    %734 = vmatprep.subr.bf16.mxu0 0
    %735 = vmatpush1.bf16.msra.mxu0 0
    %736 = vmatprep.mubr.bf16.mxu0 0
    %737 = vmatmul.mubr.bf16.gmra.mrb[0].mxu0 %v702
    %v738 = vpop.f32.mrb[0].mxu0
    %v739 = vadd.f32 %v687, %v738
    %v740 = vpop.f32.mrb[0].mxu0
    %v741 = vpop.f32.mrb[0].mxu0
    %v742 = vadd.f32 %v687, %v741
    %v743 = vpop.f32.mrb[0].mxu0
    %744 = vdwg.mxu0
    %v745 = vmul.f32 %v739, %v739
    %v746 = vmul.f32 %v742, %v742
    %v747 = vmul.f32 %v739, %v745
    %v748 = vmul.f32 %v742, %v746
    %v749 = vmul.f32 %v747, 0.044715
    %v750 = vmul.f32 %v748, 0.044715
    %v751 = vadd.f32 %v739, %v749
    %v752 = vadd.f32 %v742, %v750
    %v753 = vmul.f32 %v751, 0.7978846
    %v754 = vmul.f32 %v752, 0.7978846
    %v755 = vtanh.pop %v753
    %v756 = vtanh.pop %v754
    %v757 = vadd.f32 %v755, 1.0
    %v758 = vadd.f32 %v756, 1.0
    %v759 = vmul.f32 %v757, 0.5
    %v760 = vmul.f32 %v758, 0.5
    %v761 = vmul.f32 %v739, %v759
    %v762 = vmul.f32 %v742, %v760
    %v763 = vld [vmem:[%s15] sm:$0xf]
    %v764 = vld [vmem:[%s15 + $0x4] sm:$0xf]
    %v765 = vld [vmem:[%s15 + $0x8] sm:$0xf]
    %v766 = vld [vmem:[%s15 + $0xc] sm:$0xf]
    %v767 = vld [vmem:[%s15 + $0x10] sm:$0xf]
    %v768 = vld [vmem:[%s15 + $0x14] sm:$0xf]
    %v769 = vld [vmem:[%s15 + $0x18] sm:$0xf]
    %v770 = vld [vmem:[%s15 + $0x1c] sm:$0xf]
    %v771 = vpack.c.bf16 %v762, %v761
    %v772 = vld [vmem:[%s16] sm:$0x1]
    %v774 = vlaneseq
    %v775 = vshrl.u32 %v774, 7
    %v776 = vsub.s32 0, %v775
    %v777 = vrot.slane %v772, %v776
    %v787 = vunpack.c.l.b16 %v763
    %v788 = vunpack.c.l.b16 %v764
    %v789 = vunpack.c.l.b16 %v765
    %v790 = vunpack.c.l.b16 %v766
    %v791 = vunpack.c.l.b16 %v767
    %v792 = vunpack.c.l.b16 %v768
    %v793 = vunpack.c.l.b16 %v769
    %v794 = vunpack.c.l.b16 %v770
    %v795 = vpack.c.b16 %v788, %v787
    %v796 = vpack.c.b16 %v790, %v789
    %v797 = vpack.c.b16 %v792, %v791
    %v798 = vpack.c.b16 %v794, %v793
    %vm803 = vcmask 523264
    %v805 = vsel %vm803, %v771, 0
    %807 = vmatprep.subr.bf16.mxu0 0
    %808 = vmatpush1.bf16.msra.mxu0 %v795
    %809 = vmatprep.subr.bf16.mxu0 0
    %810 = vmatpush1.bf16.msra.mxu0 %v796
    %811 = vmatprep.subr.bf16.mxu0 0
    %812 = vmatpush1.bf16.msra.mxu0 %v797
    %813 = vmatprep.subr.bf16.mxu0 0
    %814 = vmatpush1.bf16.msra.mxu0 %v798
    %815 = vmatprep.subr.bf16.mxu0 0
    %816 = vmatpush1.bf16.msra.mxu0 0
    %817 = vmatprep.subr.bf16.mxu0 0
    %818 = vmatpush1.bf16.msra.mxu0 0
    %819 = vmatprep.subr.bf16.mxu0 0
    %820 = vmatpush1.bf16.msra.mxu0 0
    %821 = vmatprep.subr.bf16.mxu0 0
    %822 = vmatpush1.bf16.msra.mxu0 0
    %823 = vmatprep.subr.bf16.mxu0 0
    %824 = vmatpush1.bf16.msra.mxu0 0
    %825 = vmatprep.subr.bf16.mxu0 0
    %826 = vmatpush1.bf16.msra.mxu0 0
    %827 = vmatprep.subr.bf16.mxu0 0
    %828 = vmatpush1.bf16.msra.mxu0 0
    %829 = vmatprep.subr.bf16.mxu0 0
    %830 = vmatpush1.bf16.msra.mxu0 0
    %831 = vmatprep.subr.bf16.mxu0 0
    %832 = vmatpush1.bf16.msra.mxu0 0
    %833 = vmatprep.subr.bf16.mxu0 0
    %834 = vmatpush1.bf16.msra.mxu0 0
    %835 = vmatprep.subr.bf16.mxu0 0
    %836 = vmatpush1.bf16.msra.mxu0 0
    %837 = vmatprep.subr.bf16.mxu0 0
    %838 = vmatpush1.bf16.msra.mxu0 0
    %839 = vmatprep.mubr.bf16.mxu0 0
    %840 = vmatmul.mubr.bf16.gmra.mrb[0].mxu0 %v805
    %v841 = vpop.f32.mrb[0].mxu0
    %v842 = vadd.f32 %v777, %v841
    %v843 = vpop.f32.mrb[0].mxu0
    %v844 = vpop.f32.mrb[0].mxu0
    %v845 = vadd.f32 %v777, %v844
    %v846 = vpop.f32.mrb[0].mxu0
    %847 = vdwg.mxu0
    %v848 = vadd.f32 %v675, %v842
    %v849 = vadd.f32 %v676, %v845
    %v850 = vld [vmem:[%s17] sm:$0x1]
    %v851 = vld [vmem:[%s18] sm:$0x1]
    %v852 = vsel %vm217, %v848, 0.0
    %853 = vadd.xlane.f32.xlu0 %v852
    %v854 = vpop.xlane.xlu0 %853
    %v855 = vsel %vm217, %v849, 0.0
    %856 = vadd.xlane.f32.xlu0 %v855
    %v857 = vpop.xlane.xlu0 %856
    %v858 = vmul.f32 %v854, %v224
    %v859 = vmul.f32 %v857, %v224
    %v860 = vsub.f32 %v848, %v858
    %v861 = vsub.f32 %v849, %v859
    %v862 = vmul.f32 %v860, %v860
    %v863 = vmul.f32 %v861, %v861
    %v864 = vsel %vm217, %v862, 0.0
    %865 = vadd.xlane.f32.xlu0 %v864
    %v866 = vpop.xlane.xlu0 %865
    %v867 = vsel %vm217, %v863, 0.0
    %868 = vadd.xlane.f32.xlu0 %v867
    %v869 = vpop.xlane.xlu0 %868
    %v870 = vmul.f32 %v866, %v224
    %v871 = vmul.f32 %v869, %v224
    %v872 = vadd.f32 %v870, 1e-12
    %v873 = vadd.f32 %v871, 1e-12
    %v874 = vrsqrt.pop %v872
    %v875 = vrsqrt.pop %v873
    %v876 = vmul.f32 %v860, %v874
    %v877 = vmul.f32 %v861, %v875
    %v879 = vlaneseq
    %v880 = vshrl.u32 %v879, 7
    %v881 = vsub.s32 0, %v880
    %v882 = vrot.slane %v850, %v881
    %v884 = vmul.f32 %v876, %v882
    %v885 = vmul.f32 %v877, %v882
    %v887 = vlaneseq
    %v888 = vshrl.u32 %v887, 7
    %v889 = vsub.s32 0, %v888
    %v890 = vrot.slane %v851, %v889
    %v892 = vadd.f32 %v884, %v890
    %v893 = vadd.f32 %v885, %v890
    %s894 = scalar_lea.vmem %s7, 16
    %v895 = vld [vmem:[%s894] sm:$0xf]
    %v896 = vld [vmem:[%s894 + $0x4] sm:$0xf]
    %v897 = vld [vmem:[%s894 + $0x8] sm:$0xf]
    %v898 = vld [vmem:[%s894 + $0xc] sm:$0xf]
    %v899 = vpack.c.bf16 %v893, %v892
    %s900 = scalar_lea.vmem %s8, 1
    %v901 = vld [vmem:[%s900] sm:$0x1]
    %v903 = vlaneseq
    %v904 = vshrl.u32 %v903, 7
    %v905 = vsub.s32 0, %v904
    %v906 = vrot.slane %v901, %v905
    %v912 = vunpack.c.l.b16 %v895
    %v913 = vunpack.c.l.b16 %v896
    %v914 = vunpack.c.l.b16 %v897
    %v915 = vunpack.c.l.b16 %v898
    %v916 = vpack.c.b16 %v913, %v912
    %v917 = vpack.c.b16 %v915, %v914
    %v921 = vsel %vm217, %v899, 0
    %923 = vmatprep.subr.bf16.mxu0 0
    %924 = vmatpush1.bf16.msra.mxu0 %v916
    %925 = vmatprep.subr.bf16.mxu0 0
    %926 = vmatpush1.bf16.msra.mxu0 %v917
    %927 = vmatprep.subr.bf16.mxu0 0
    %928 = vmatpush1.bf16.msra.mxu0 0
    %929 = vmatprep.subr.bf16.mxu0 0
    %930 = vmatpush1.bf16.msra.mxu0 0
    %931 = vmatprep.subr.bf16.mxu0 0
    %932 = vmatpush1.bf16.msra.mxu0 0
    %933 = vmatprep.subr.bf16.mxu0 0
    %934 = vmatpush1.bf16.msra.mxu0 0
    %935 = vmatprep.subr.bf16.mxu0 0
    %936 = vmatpush1.bf16.msra.mxu0 0
    %937 = vmatprep.subr.bf16.mxu0 0
    %938 = vmatpush1.bf16.msra.mxu0 0
    %939 = vmatprep.subr.bf16.mxu0 0
    %940 = vmatpush1.bf16.msra.mxu0 0
    %941 = vmatprep.subr.bf16.mxu0 0
    %942 = vmatpush1.bf16.msra.mxu0 0
    %943 = vmatprep.subr.bf16.mxu0 0
    %944 = vmatpush1.bf16.msra.mxu0 0
    %945 = vmatprep.subr.bf16.mxu0 0
    %946 = vmatpush1.bf16.msra.mxu0 0
    %947 = vmatprep.subr.bf16.mxu0 0
    %948 = vmatpush1.bf16.msra.mxu0 0
    %949 = vmatprep.subr.bf16.mxu0 0
    %950 = vmatpush1.bf16.msra.mxu0 0
    %951 = vmatprep.subr.bf16.mxu0 0
    %952 = vmatpush1.bf16.msra.mxu0 0
    %953 = vmatprep.subr.bf16.mxu0 0
    %954 = vmatpush1.bf16.msra.mxu0 0
    %955 = vmatprep.mubr.bf16.mxu0 0
    %956 = vmatmul.mubr.bf16.gmra.mrb[0].mxu0 %v921
    %v957 = vpop.f32.mrb[0].mxu0
    %v958 = vadd.f32 %v906, %v957
    %v959 = vpop.f32.mrb[0].mxu0
    %v960 = vpop.f32.mrb[0].mxu0
    %v961 = vadd.f32 %v906, %v960
    %v962 = vpop.f32.mrb[0].mxu0
    %963 = vdwg.mxu0
    %965 = vrot.lane.b32.xlu0 %v958, 112
    %v966 = vpop.permute.xlu0 %965
    %969 = vrot.lane.b32.xlu0 %v961, 112
    %v970 = vpop.permute.xlu0 %969
    %972 = vrot.lane.b32.xlu0 %v958, 96
    %v973 = vpop.permute.xlu0 %972
    %974 = vrot.lane.b32.xlu0 %v966, 96
    %v975 = vpop.permute.xlu0 %974
    %976 = vrot.lane.b32.xlu0 %v961, 96
    %v977 = vpop.permute.xlu0 %976
    %978 = vrot.lane.b32.xlu0 %v970, 96
    %v979 = vpop.permute.xlu0 %978
    %984 = vxpose.xlu0.b32.start [1/16] %v973, 128
    %985 = vxpose.xlu0.b32.cont [2/16] %v975, 128
    %986 = vxpose.xlu0.b32.cont [3/16] %v977, 128
    %987 = vxpose.xlu0.b32.cont [4/16] %v979, 128
    %988 = vxpose.xlu0.b32.cont [5/16] 0.0, 128
    %989 = vxpose.xlu0.b32.cont [6/16] 0.0, 128
    %990 = vxpose.xlu0.b32.cont [7/16] 0.0, 128
    %991 = vxpose.xlu0.b32.cont [8/16] 0.0, 128
    %992 = vxpose.xlu0.b32.cont [9/16] 0.0, 128
    %993 = vxpose.xlu0.b32.cont [10/16] 0.0, 128
    %994 = vxpose.xlu0.b32.cont [11/16] 0.0, 128
    %995 = vxpose.xlu0.b32.cont [12/16] 0.0, 128
    %996 = vxpose.xlu0.b32.cont [13/16] 0.0, 128
    %997 = vxpose.xlu0.b32.cont [14/16] 0.0, 128
    %998 = vxpose.xlu0.b32.cont [15/16] 0.0, 128
    %999 = vxpose.xlu0.b32.end [16/16] 0.0, 128
    %v1000 = vpop.trf.xlu0
    %v1001 = vpop.trf.xlu0
    %v1002 = vpop.trf.xlu0
    %v1003 = vpop.trf.xlu0
    %v1004 = vpop.trf.xlu0
    %v1005 = vpop.trf.xlu0
    %v1006 = vpop.trf.xlu0
    %v1007 = vpop.trf.xlu0
    %v1008 = vpop.trf.xlu0
    %v1009 = vpop.trf.xlu0
    %v1010 = vpop.trf.xlu0
    %v1011 = vpop.trf.xlu0
    %v1012 = vpop.trf.xlu0
    %v1013 = vpop.trf.xlu0
    %v1014 = vpop.trf.xlu0
    %v1015 = vpop.trf.xlu0
    %v1016 = vpack.c.bf16 %v966, %v958
    %v1017 = vpack.c.bf16 %v970, %v961
    %v1018 = vpack.c.bf16 %v1001, %v1000
    %v1020 = vsel %vm388, %v1016, 0
    %v1023 = vsel %vm388, %v1017, 0
    %1025 = vmatprep.subr.bf16.mxu0 0
    %1026 = vmatpush1.bf16.msra.mxu0 %v1018
    %1027 = vmatprep.subr.bf16.mxu0 0
    %1028 = vmatpush1.bf16.msra.mxu0 0
    %1029 = vmatprep.subr.bf16.mxu0 0
    %1030 = vmatpush1.bf16.msra.mxu0 0
    %1031 = vmatprep.subr.bf16.mxu0 0
    %1032 = vmatpush1.bf16.msra.mxu0 0
    %1033 = vmatprep.subr.bf16.mxu0 0
    %1034 = vmatpush1.bf16.msra.mxu0 0
    %1035 = vmatprep.subr.bf16.mxu0 0
    %1036 = vmatpush1.bf16.msra.mxu0 0
    %1037 = vmatprep.subr.bf16.mxu0 0
    %1038 = vmatpush1.bf16.msra.mxu0 0
    %1039 = vmatprep.subr.bf16.mxu0 0
    %1040 = vmatpush1.bf16.msra.mxu0 0
    %1041 = vmatprep.subr.bf16.mxu0 0
    %1042 = vmatpush1.bf16.msra.mxu0 0
    %1043 = vmatprep.subr.bf16.mxu0 0
    %1044 = vmatpush1.bf16.msra.mxu0 0
    %1045 = vmatprep.subr.bf16.mxu0 0
    %1046 = vmatpush1.bf16.msra.mxu0 0
    %1047 = vmatprep.subr.bf16.mxu0 0
    %1048 = vmatpush1.bf16.msra.mxu0 0
    %1049 = vmatprep.subr.bf16.mxu0 0
    %1050 = vmatpush1.bf16.msra.mxu0 0
    %1051 = vmatprep.subr.bf16.mxu0 0
    %1052 = vmatpush1.bf16.msra.mxu0 0
    %1053 = vmatprep.subr.bf16.mxu0 0
    %1054 = vmatpush1.bf16.msra.mxu0 0
    %1055 = vmatprep.subr.bf16.mxu0 0
    %1056 = vmatpush1.bf16.msra.mxu0 0
    %1057 = vmatprep.mubr.bf16.mxu0 0
    %1058 = vmatmul.mubr.bf16.gmra.mrb[0].mxu0 %v1020
    %v1059 = vpop.f32.mrb[0].mxu0
    %v1060 = vadd.f32 %v261, %v1059
    %v1061 = vpop.f32.mrb[0].mxu0
    %v1062 = vpop.f32.mrb[0].mxu0
    %v1063 = vadd.f32 %v262, %v1062
    %v1064 = vpop.f32.mrb[0].mxu0
    %1065 = vmatprep.mubr.bf16.mxu0 0
    %1066 = vmatmul.mubr.bf16.gmra.mrb[0].mxu0 %v1023
    %v1067 = vpop.f32.mrb[0].mxu0
    %v1068 = vadd.f32 %v263, %v1067
    %v1069 = vpop.f32.mrb[0].mxu0
    %v1070 = vpop.f32.mrb[0].mxu0
    %v1071 = vadd.f32 %v264, %v1070
    %v1072 = vpop.f32.mrb[0].mxu0
    %1073 = vdwg.mxu0
    %v1074 = vsel %vm217, %v1060, -inf
    %1075 = vmax.xlane.f32.xlu0 %v1074
    %v1076 = vpop.xlane.xlu0 %1075
    %v1077 = vsel %vm217, %v1063, -inf
    %1078 = vmax.xlane.f32.xlu0 %v1077
    %v1079 = vpop.xlane.xlu0 %1078
    %v1080 = vsel %vm217, %v1068, -inf
    %1081 = vmax.xlane.f32.xlu0 %v1080
    %v1082 = vpop.xlane.xlu0 %1081
    %v1083 = vsel %vm217, %v1071, -inf
    %1084 = vmax.xlane.f32.xlu0 %v1083
    %v1085 = vpop.xlane.xlu0 %1084
    %v1086 = vsub.f32 %v1060, %v1076
    %v1087 = vsub.f32 %v1063, %v1079
    %v1088 = vsub.f32 %v1068, %v1082
    %v1089 = vsub.f32 %v1071, %v1085
    %v1090 = vmul.f32 %v1086, 1.442695
    %v1091 = vpow.pop %v1090
    %v1092 = vmul.f32 %v1087, 1.442695
    %v1093 = vpow.pop %v1092
    %v1094 = vmul.f32 %v1088, 1.442695
    %v1095 = vpow.pop %v1094
    %v1096 = vmul.f32 %v1089, 1.442695
    %v1097 = vpow.pop %v1096
    %v1098 = vsel %vm217, %v1091, 0.0
    %1099 = vadd.xlane.f32.xlu0 %v1098
    %v1100 = vpop.xlane.xlu0 %1099
    %v1101 = vsel %vm217, %v1093, 0.0
    %1102 = vadd.xlane.f32.xlu0 %v1101
    %v1103 = vpop.xlane.xlu0 %1102
    %v1104 = vsel %vm217, %v1095, 0.0
    %1105 = vadd.xlane.f32.xlu0 %v1104
    %v1106 = vpop.xlane.xlu0 %1105
    %v1107 = vsel %vm217, %v1097, 0.0
    %1108 = vadd.xlane.f32.xlu0 %v1107
    %v1109 = vpop.xlane.xlu0 %1108
    %v1110 = vrcp.pop %v1100
    %v1111 = vrcp.pop %v1103
    %v1112 = vrcp.pop %v1106
    %v1113 = vrcp.pop %v1109
    %v1114 = vmul.f32 %v1091, %v1110
    %v1115 = vmul.f32 %v1093, %v1111
    %v1116 = vmul.f32 %v1095, %v1112
    %v1117 = vmul.f32 %v1097, %v1113
    %v1118 = vpack.c.bf16 %v1115, %v1114
    %v1119 = vpack.c.bf16 %v1117, %v1116
    %1122 = vrot.lane.b32.xlu0 %v1016, 64
    %v1123 = vpop.permute.xlu0 %1122
    %1124 = vrot.lane.b32.xlu0 %v1017, 64
    %v1125 = vpop.permute.xlu0 %1124
    %v1129 = vsel %vm217, %v1118, 0
    %v1132 = vsel %vm217, %v1119, 0
    %1134 = vmatprep.subr.bf16.mxu0 0
    %1135 = vmatpush1.bf16.msra.mxu0 %v1123
    %1136 = vmatprep.subr.bf16.mxu0 0
    %1137 = vmatpush1.bf16.msra.mxu0 %v1125
    %1138 = vmatprep.subr.bf16.mxu0 0
    %1139 = vmatpush1.bf16.msra.mxu0 0
    %1140 = vmatprep.subr.bf16.mxu0 0
    %1141 = vmatpush1.bf16.msra.mxu0 0
    %1142 = vmatprep.subr.bf16.mxu0 0
    %1143 = vmatpush1.bf16.msra.mxu0 0
    %1144 = vmatprep.subr.bf16.mxu0 0
    %1145 = vmatpush1.bf16.msra.mxu0 0
    %1146 = vmatprep.subr.bf16.mxu0 0
    %1147 = vmatpush1.bf16.msra.mxu0 0
    %1148 = vmatprep.subr.bf16.mxu0 0
    %1149 = vmatpush1.bf16.msra.mxu0 0
    %1150 = vmatprep.subr.bf16.mxu0 0
    %1151 = vmatpush1.bf16.msra.mxu0 0
    %1152 = vmatprep.subr.bf16.mxu0 0
    %1153 = vmatpush1.bf16.msra.mxu0 0
    %1154 = vmatprep.subr.bf16.mxu0 0
    %1155 = vmatpush1.bf16.msra.mxu0 0
    %1156 = vmatprep.subr.bf16.mxu0 0
    %1157 = vmatpush1.bf16.msra.mxu0 0
    %1158 = vmatprep.subr.bf16.mxu0 0
    %1159 = vmatpush1.bf16.msra.mxu0 0
    %1160 = vmatprep.subr.bf16.mxu0 0
    %1161 = vmatpush1.bf16.msra.mxu0 0
    %1162 = vmatprep.subr.bf16.mxu0 0
    %1163 = vmatpush1.bf16.msra.mxu0 0
    %1164 = vmatprep.subr.bf16.mxu0 0
    %1165 = vmatpush1.bf16.msra.mxu0 0
    %1166 = vmatprep.mubr.bf16.mxu0 0
    %1167 = vmatmul.mubr.bf16.gmra.mrb[0].mxu0 %v1129
    %v1168 = vpop.f32.mrb[0].mxu0
    %v1169 = vadd.f32 0.0, %v1168
    %v1170 = vpop.f32.mrb[0].mxu0
    %v1171 = vpop.f32.mrb[0].mxu0
    %v1172 = vadd.f32 0.0, %v1171
    %v1173 = vpop.f32.mrb[0].mxu0
    %1174 = vmatprep.mubr.bf16.mxu0 0
    %1175 = vmatmul.mubr.bf16.gmra.mrb[0].mxu0 %v1132
    %v1176 = vpop.f32.mrb[0].mxu0
    %v1177 = vadd.f32 0.0, %v1176
    %v1178 = vpop.f32.mrb[0].mxu0
    %v1179 = vpop.f32.mrb[0].mxu0
    %v1180 = vadd.f32 0.0, %v1179
    %v1181 = vpop.f32.mrb[0].mxu0
    %1182 = vdwg.mxu0
    %1184 = vrot.lane.b32.xlu0 %v1172, 16
    %v1185 = vpop.permute.xlu0 %1184
    %v1187 = vsel %vm388, %v1169, %v1185
    %1189 = vrot.lane.b32.xlu0 %v1180, 16
    %v1190 = vpop.permute.xlu0 %1189
    %v1192 = vsel %vm388, %v1177, %v1190
    %s1193 = scalar_lea.vmem %s9, 16
    %v1194 = vld [vmem:[%s1193] sm:$0xf]
    %v1195 = vld [vmem:[%s1193 + $0x4] sm:$0xf]
    %v1196 = vld [vmem:[%s1193 + $0x8] sm:$0xf]
    %v1197 = vld [vmem:[%s1193 + $0xc] sm:$0xf]
    %v1198 = vpack.c.bf16 %v1192, %v1187
    %s1199 = scalar_lea.vmem %s10, 1
    %v1200 = vld [vmem:[%s1199] sm:$0x1]
    %v1202 = vlaneseq
    %v1203 = vshrl.u32 %v1202, 7
    %v1204 = vsub.s32 0, %v1203
    %v1205 = vrot.slane %v1200, %v1204
    %v1211 = vunpack.c.l.b16 %v1194
    %v1212 = vunpack.c.l.b16 %v1195
    %v1213 = vunpack.c.l.b16 %v1196
    %v1214 = vunpack.c.l.b16 %v1197
    %v1215 = vpack.c.b16 %v1212, %v1211
    %v1216 = vpack.c.b16 %v1214, %v1213
    %v1220 = vsel %vm217, %v1198, 0
    %1222 = vmatprep.subr.bf16.mxu0 0
    %1223 = vmatpush1.bf16.msra.mxu0 %v1215
    %1224 = vmatprep.subr.bf16.mxu0 0
    %1225 = vmatpush1.bf16.msra.mxu0 %v1216
    %1226 = vmatprep.subr.bf16.mxu0 0
    %1227 = vmatpush1.bf16.msra.mxu0 0
    %1228 = vmatprep.subr.bf16.mxu0 0
    %1229 = vmatpush1.bf16.msra.mxu0 0
    %1230 = vmatprep.subr.bf16.mxu0 0
    %1231 = vmatpush1.bf16.msra.mxu0 0
    %1232 = vmatprep.subr.bf16.mxu0 0
    %1233 = vmatpush1.bf16.msra.mxu0 0
    %1234 = vmatprep.subr.bf16.mxu0 0
    %1235 = vmatpush1.bf16.msra.mxu0 0
    %1236 = vmatprep.subr.bf16.mxu0 0
    %1237 = vmatpush1.bf16.msra.mxu0 0
    %1238 = vmatprep.subr.bf16.mxu0 0
    %1239 = vmatpush1.bf16.msra.mxu0 0
    %1240 = vmatprep.subr.bf16.mxu0 0
    %1241 = vmatpush1.bf16.msra.mxu0 0
    %1242 = vmatprep.subr.bf16.mxu0 0
    %1243 = vmatpush1.bf16.msra.mxu0 0
    %1244 = vmatprep.subr.bf16.mxu0 0
    %1245 = vmatpush1.bf16.msra.mxu0 0
    %1246 = vmatprep.subr.bf16.mxu0 0
    %1247 = vmatpush1.bf16.msra.mxu0 0
    %1248 = vmatprep.subr.bf16.mxu0 0
    %1249 = vmatpush1.bf16.msra.mxu0 0
    %1250 = vmatprep.subr.bf16.mxu0 0
    %1251 = vmatpush1.bf16.msra.mxu0 0
    %1252 = vmatprep.subr.bf16.mxu0 0
    %1253 = vmatpush1.bf16.msra.mxu0 0
    %1254 = vmatprep.mubr.bf16.mxu0 0
    %1255 = vmatmul.mubr.bf16.gmra.mrb[0].mxu0 %v1220
    %v1256 = vpop.f32.mrb[0].mxu0
    %v1257 = vadd.f32 %v1205, %v1256
    %v1258 = vpop.f32.mrb[0].mxu0
    %v1259 = vpop.f32.mrb[0].mxu0
    %v1260 = vadd.f32 %v1205, %v1259
    %v1261 = vpop.f32.mrb[0].mxu0
    %1262 = vdwg.mxu0
    %v1263 = vadd.f32 %v892, %v1257
    %v1264 = vadd.f32 %v893, %v1260
    %s1265 = scalar_lea.vmem %s11, 1
    %v1266 = vld [vmem:[%s1265] sm:$0x1]
    %s1267 = scalar_lea.vmem %s12, 1
    %v1268 = vld [vmem:[%s1267] sm:$0x1]
    %v1269 = vsel %vm217, %v1263, 0.0
    %1270 = vadd.xlane.f32.xlu0 %v1269
    %v1271 = vpop.xlane.xlu0 %1270
    %v1272 = vsel %vm217, %v1264, 0.0
    %1273 = vadd.xlane.f32.xlu0 %v1272
    %v1274 = vpop.xlane.xlu0 %1273
    %v1275 = vmul.f32 %v1271, %v224
    %v1276 = vmul.f32 %v1274, %v224
    %v1277 = vsub.f32 %v1263, %v1275
    %v1278 = vsub.f32 %v1264, %v1276
    %v1279 = vmul.f32 %v1277, %v1277
    %v1280 = vmul.f32 %v1278, %v1278
    %v1281 = vsel %vm217, %v1279, 0.0
    %1282 = vadd.xlane.f32.xlu0 %v1281
    %v1283 = vpop.xlane.xlu0 %1282
    %v1284 = vsel %vm217, %v1280, 0.0
    %1285 = vadd.xlane.f32.xlu0 %v1284
    %v1286 = vpop.xlane.xlu0 %1285
    %v1287 = vmul.f32 %v1283, %v224
    %v1288 = vmul.f32 %v1286, %v224
    %v1289 = vadd.f32 %v1287, 1e-12
    %v1290 = vadd.f32 %v1288, 1e-12
    %v1291 = vrsqrt.pop %v1289
    %v1292 = vrsqrt.pop %v1290
    %v1293 = vmul.f32 %v1277, %v1291
    %v1294 = vmul.f32 %v1278, %v1292
    %v1296 = vlaneseq
    %v1297 = vshrl.u32 %v1296, 7
    %v1298 = vsub.s32 0, %v1297
    %v1299 = vrot.slane %v1266, %v1298
    %v1301 = vmul.f32 %v1293, %v1299
    %v1302 = vmul.f32 %v1294, %v1299
    %v1304 = vlaneseq
    %v1305 = vshrl.u32 %v1304, 7
    %v1306 = vsub.s32 0, %v1305
    %v1307 = vrot.slane %v1268, %v1306
    %v1309 = vadd.f32 %v1301, %v1307
    %v1310 = vadd.f32 %v1302, %v1307
    %s1311 = scalar_lea.vmem %s13, 16
    %v1312 = vld [vmem:[%s1311] sm:$0xf]
    %v1313 = vld [vmem:[%s1311 + $0x4] sm:$0xf]
    %v1314 = vld [vmem:[%s1311 + $0x8] sm:$0xf]
    %v1315 = vld [vmem:[%s1311 + $0xc] sm:$0xf]
    %v1316 = vpack.c.bf16 %v1310, %v1309
    %s1317 = scalar_lea.vmem %s14, 1
    %v1318 = vld [vmem:[%s1317] sm:$0x1]
    %v1320 = vlaneseq
    %v1321 = vshrl.u32 %v1320, 7
    %v1322 = vsub.s32 0, %v1321
    %v1323 = vrot.slane %v1318, %v1322
    %v1329 = vunpack.c.l.b16 %v1312
    %v1330 = vunpack.c.l.b16 %v1313
    %v1331 = vunpack.c.l.b16 %v1314
    %v1332 = vunpack.c.l.b16 %v1315
    %v1333 = vpack.c.b16 %v1330, %v1329
    %v1334 = vpack.c.b16 %v1332, %v1331
    %v1338 = vsel %vm217, %v1316, 0
    %1340 = vmatprep.subr.bf16.mxu0 0
    %1341 = vmatpush1.bf16.msra.mxu0 %v1333
    %1342 = vmatprep.subr.bf16.mxu0 0
    %1343 = vmatpush1.bf16.msra.mxu0 %v1334
    %1344 = vmatprep.subr.bf16.mxu0 0
    %1345 = vmatpush1.bf16.msra.mxu0 0
    %1346 = vmatprep.subr.bf16.mxu0 0
    %1347 = vmatpush1.bf16.msra.mxu0 0
    %1348 = vmatprep.subr.bf16.mxu0 0
    %1349 = vmatpush1.bf16.msra.mxu0 0
    %1350 = vmatprep.subr.bf16.mxu0 0
    %1351 = vmatpush1.bf16.msra.mxu0 0
    %1352 = vmatprep.subr.bf16.mxu0 0
    %1353 = vmatpush1.bf16.msra.mxu0 0
    %1354 = vmatprep.subr.bf16.mxu0 0
    %1355 = vmatpush1.bf16.msra.mxu0 0
    %1356 = vmatprep.subr.bf16.mxu0 0
    %1357 = vmatpush1.bf16.msra.mxu0 0
    %1358 = vmatprep.subr.bf16.mxu0 0
    %1359 = vmatpush1.bf16.msra.mxu0 0
    %1360 = vmatprep.subr.bf16.mxu0 0
    %1361 = vmatpush1.bf16.msra.mxu0 0
    %1362 = vmatprep.subr.bf16.mxu0 0
    %1363 = vmatpush1.bf16.msra.mxu0 0
    %1364 = vmatprep.subr.bf16.mxu0 0
    %1365 = vmatpush1.bf16.msra.mxu0 0
    %1366 = vmatprep.subr.bf16.mxu0 0
    %1367 = vmatpush1.bf16.msra.mxu0 0
    %1368 = vmatprep.subr.bf16.mxu0 0
    %1369 = vmatpush1.bf16.msra.mxu0 0
    %1370 = vmatprep.subr.bf16.mxu0 0
    %1371 = vmatpush1.bf16.msra.mxu0 0
    %1372 = vmatprep.mubr.bf16.mxu0 0
    %1373 = vmatmul.mubr.bf16.gmra.mrb[0].mxu0 %v1338
    %v1374 = vpop.f32.mrb[0].mxu0
    %v1375 = vadd.f32 %v1323, %v1374
    %v1376 = vpop.f32.mrb[0].mxu0
    %v1377 = vpop.f32.mrb[0].mxu0
    %v1378 = vadd.f32 %v1323, %v1377
    %v1379 = vpop.f32.mrb[0].mxu0
    %1380 = vdwg.mxu0
    %v1381 = vmul.f32 %v1375, %v1375
    %v1382 = vmul.f32 %v1378, %v1378
    %v1383 = vmul.f32 %v1375, %v1381
    %v1384 = vmul.f32 %v1378, %v1382
    %v1385 = vmul.f32 %v1383, 0.044715
    %v1386 = vmul.f32 %v1384, 0.044715
    %v1387 = vadd.f32 %v1375, %v1385
    %v1388 = vadd.f32 %v1378, %v1386
    %v1389 = vmul.f32 %v1387, 0.7978846
    %v1390 = vmul.f32 %v1388, 0.7978846
    %v1391 = vtanh.pop %v1389
    %v1392 = vtanh.pop %v1390
    %v1393 = vadd.f32 %v1391, 1.0
    %v1394 = vadd.f32 %v1392, 1.0
    %v1395 = vmul.f32 %v1393, 0.5
    %v1396 = vmul.f32 %v1394, 0.5
    %v1397 = vmul.f32 %v1375, %v1395
    %v1398 = vmul.f32 %v1378, %v1396
    %s1399 = scalar_lea.vmem %s15, 32
    %v1400 = vld [vmem:[%s1399] sm:$0xf]
    %v1401 = vld [vmem:[%s1399 + $0x4] sm:$0xf]
    %v1402 = vld [vmem:[%s1399 + $0x8] sm:$0xf]
    %v1403 = vld [vmem:[%s1399 + $0xc] sm:$0xf]
    %v1404 = vld [vmem:[%s1399 + $0x10] sm:$0xf]
    %v1405 = vld [vmem:[%s1399 + $0x14] sm:$0xf]
    %v1406 = vld [vmem:[%s1399 + $0x18] sm:$0xf]
    %v1407 = vld [vmem:[%s1399 + $0x1c] sm:$0xf]
    %v1408 = vpack.c.bf16 %v1398, %v1397
    %s1409 = scalar_lea.vmem %s16, 1
    %v1410 = vld [vmem:[%s1409] sm:$0x1]
    %v1412 = vlaneseq
    %v1413 = vshrl.u32 %v1412, 7
    %v1414 = vsub.s32 0, %v1413
    %v1415 = vrot.slane %v1410, %v1414
    %v1425 = vunpack.c.l.b16 %v1400
    %v1426 = vunpack.c.l.b16 %v1401
    %v1427 = vunpack.c.l.b16 %v1402
    %v1428 = vunpack.c.l.b16 %v1403
    %v1429 = vunpack.c.l.b16 %v1404
    %v1430 = vunpack.c.l.b16 %v1405
    %v1431 = vunpack.c.l.b16 %v1406
    %v1432 = vunpack.c.l.b16 %v1407
    %v1433 = vpack.c.b16 %v1426, %v1425
    %v1434 = vpack.c.b16 %v1428, %v1427
    %v1435 = vpack.c.b16 %v1430, %v1429
    %v1436 = vpack.c.b16 %v1432, %v1431
    %v1442 = vsel %vm803, %v1408, 0
    %1444 = vmatprep.subr.bf16.mxu0 0
    %1445 = vmatpush1.bf16.msra.mxu0 %v1433
    %1446 = vmatprep.subr.bf16.mxu0 0
    %1447 = vmatpush1.bf16.msra.mxu0 %v1434
    %1448 = vmatprep.subr.bf16.mxu0 0
    %1449 = vmatpush1.bf16.msra.mxu0 %v1435
    %1450 = vmatprep.subr.bf16.mxu0 0
    %1451 = vmatpush1.bf16.msra.mxu0 %v1436
    %1452 = vmatprep.subr.bf16.mxu0 0
    %1453 = vmatpush1.bf16.msra.mxu0 0
    %1454 = vmatprep.subr.bf16.mxu0 0
    %1455 = vmatpush1.bf16.msra.mxu0 0
    %1456 = vmatprep.subr.bf16.mxu0 0
    %1457 = vmatpush1.bf16.msra.mxu0 0
    %1458 = vmatprep.subr.bf16.mxu0 0
    %1459 = vmatpush1.bf16.msra.mxu0 0
    %1460 = vmatprep.subr.bf16.mxu0 0
    %1461 = vmatpush1.bf16.msra.mxu0 0
    %1462 = vmatprep.subr.bf16.mxu0 0
    %1463 = vmatpush1.bf16.msra.mxu0 0
    %1464 = vmatprep.subr.bf16.mxu0 0
    %1465 = vmatpush1.bf16.msra.mxu0 0
    %1466 = vmatprep.subr.bf16.mxu0 0
    %1467 = vmatpush1.bf16.msra.mxu0 0
    %1468 = vmatprep.subr.bf16.mxu0 0
    %1469 = vmatpush1.bf16.msra.mxu0 0
    %1470 = vmatprep.subr.bf16.mxu0 0
    %1471 = vmatpush1.bf16.msra.mxu0 0
    %1472 = vmatprep.subr.bf16.mxu0 0
    %1473 = vmatpush1.bf16.msra.mxu0 0
    %1474 = vmatprep.subr.bf16.mxu0 0
    %1475 = vmatpush1.bf16.msra.mxu0 0
    %1476 = vmatprep.mubr.bf16.mxu0 0
    %1477 = vmatmul.mubr.bf16.gmra.mrb[0].mxu0 %v1442
    %v1478 = vpop.f32.mrb[0].mxu0
    %v1479 = vadd.f32 %v1415, %v1478
    %v1480 = vpop.f32.mrb[0].mxu0
    %v1481 = vpop.f32.mrb[0].mxu0
    %v1482 = vadd.f32 %v1415, %v1481
    %v1483 = vpop.f32.mrb[0].mxu0
    %1484 = vdwg.mxu0
    %v1485 = vadd.f32 %v1309, %v1479
    %v1486 = vadd.f32 %v1310, %v1482
    %s1487 = scalar_lea.vmem %s17, 1
    %v1488 = vld [vmem:[%s1487] sm:$0x1]
    %s1489 = scalar_lea.vmem %s18, 1
    %v1490 = vld [vmem:[%s1489] sm:$0x1]
    %v1491 = vsel %vm217, %v1485, 0.0
    %1492 = vadd.xlane.f32.xlu0 %v1491
    %v1493 = vpop.xlane.xlu0 %1492
    %v1494 = vsel %vm217, %v1486, 0.0
    %1495 = vadd.xlane.f32.xlu0 %v1494
    %v1496 = vpop.xlane.xlu0 %1495
    %v1497 = vmul.f32 %v1493, %v224
    %v1498 = vmul.f32 %v1496, %v224
    %v1499 = vsub.f32 %v1485, %v1497
    %v1500 = vsub.f32 %v1486, %v1498
    %v1501 = vmul.f32 %v1499, %v1499
    %v1502 = vmul.f32 %v1500, %v1500
    %v1503 = vsel %vm217, %v1501, 0.0
    %1504 = vadd.xlane.f32.xlu0 %v1503
    %v1505 = vpop.xlane.xlu0 %1504
    %v1506 = vsel %vm217, %v1502, 0.0
    %1507 = vadd.xlane.f32.xlu0 %v1506
    %v1508 = vpop.xlane.xlu0 %1507
    %v1509 = vmul.f32 %v1505, %v224
    %v1510 = vmul.f32 %v1508, %v224
    %v1511 = vadd.f32 %v1509, 1e-12
    %v1512 = vadd.f32 %v1510, 1e-12
    %v1513 = vrsqrt.pop %v1511
    %v1514 = vrsqrt.pop %v1512
    %v1515 = vmul.f32 %v1499, %v1513
    %v1516 = vmul.f32 %v1500, %v1514
    %v1518 = vlaneseq
    %v1519 = vshrl.u32 %v1518, 7
    %v1520 = vsub.s32 0, %v1519
    %v1521 = vrot.slane %v1488, %v1520
    %v1523 = vmul.f32 %v1515, %v1521
    %v1524 = vmul.f32 %v1516, %v1521
    %v1526 = vlaneseq
    %v1527 = vshrl.u32 %v1526, 7
    %v1528 = vsub.s32 0, %v1527
    %v1529 = vrot.slane %v1490, %v1528
    %v1531 = vadd.f32 %v1523, %v1529
    %v1532 = vadd.f32 %v1524, %v1529
    %v1533 = vlaneseq
    %v1534 = vshrl.u32 %v1533, 7
    %v1535 = vmul.u32 %v1534, 8
    %vm1536 = vcmp.eq.s32.totalorder %v94, %v1535
    %v1537 = vsel %vm1536, 1, 0
    %v1538 = vcvt.s32.f32 %v1537
    %v1539 = vpack.c.bf16 %v1538, %v1538
    %v1540 = vpack.c.bf16 %v1532, %v1531
    %v1542 = vsel %vm388, %v1539, 0
    %1544 = vmatprep.subr.bf16.mxu0 0
    %1545 = vmatpush1.bf16.msra.mxu0 %v1540
    %1546 = vmatprep.subr.bf16.mxu0 0
    %1547 = vmatpush1.bf16.msra.mxu0 0
    %1548 = vmatprep.subr.bf16.mxu0 0
    %1549 = vmatpush1.bf16.msra.mxu0 0
    %1550 = vmatprep.subr.bf16.mxu0 0
    %1551 = vmatpush1.bf16.msra.mxu0 0
    %1552 = vmatprep.subr.bf16.mxu0 0
    %1553 = vmatpush1.bf16.msra.mxu0 0
    %1554 = vmatprep.subr.bf16.mxu0 0
    %1555 = vmatpush1.bf16.msra.mxu0 0
    %1556 = vmatprep.subr.bf16.mxu0 0
    %1557 = vmatpush1.bf16.msra.mxu0 0
    %1558 = vmatprep.subr.bf16.mxu0 0
    %1559 = vmatpush1.bf16.msra.mxu0 0
    %1560 = vmatprep.subr.bf16.mxu0 0
    %1561 = vmatpush1.bf16.msra.mxu0 0
    %1562 = vmatprep.subr.bf16.mxu0 0
    %1563 = vmatpush1.bf16.msra.mxu0 0
    %1564 = vmatprep.subr.bf16.mxu0 0
    %1565 = vmatpush1.bf16.msra.mxu0 0
    %1566 = vmatprep.subr.bf16.mxu0 0
    %1567 = vmatpush1.bf16.msra.mxu0 0
    %1568 = vmatprep.subr.bf16.mxu0 0
    %1569 = vmatpush1.bf16.msra.mxu0 0
    %1570 = vmatprep.subr.bf16.mxu0 0
    %1571 = vmatpush1.bf16.msra.mxu0 0
    %1572 = vmatprep.subr.bf16.mxu0 0
    %1573 = vmatpush1.bf16.msra.mxu0 0
    %1574 = vmatprep.subr.bf16.mxu0 0
    %1575 = vmatpush1.bf16.msra.mxu0 0
    %1576 = vmatprep.mubr.bf16.mxu0 0
    %1577 = vmatmul.mubr.bf16.gmra.mrb[0].mxu0 %v1542
    %v1578 = vpop.f32.mrb[0].mxu0
    %v1579 = vadd.f32 0.0, %v1578
    %v1580 = vpop.f32.mrb[0].mxu0
    %v1581 = vpop.f32.mrb[0].mxu0
    %v1582 = vpop.f32.mrb[0].mxu0
    %1583 = vdwg.mxu0
    %v1584 = vld [vmem:[%s19] sm:$0xf]
    %v1585 = vld [vmem:[%s19 + $0x4] sm:$0xf]
    %v1586 = vld [vmem:[%s19 + $0x8] sm:$0xf]
    %v1587 = vld [vmem:[%s19 + $0xc] sm:$0xf]
    %v1588 = vpack.c.bf16 %v1579, %v1579
    %v1589 = vld [vmem:[%s20] sm:$0x1]
    %v1591 = vlaneseq
    %v1592 = vshrl.u32 %v1591, 7
    %v1593 = vsub.s32 0, %v1592
    %v1594 = vrot.slane %v1589, %v1593
    %v1600 = vunpack.c.l.b16 %v1584
    %v1601 = vunpack.c.l.b16 %v1585
    %v1602 = vunpack.c.l.b16 %v1586
    %v1603 = vunpack.c.l.b16 %v1587
    %v1604 = vpack.c.b16 %v1601, %v1600
    %v1605 = vpack.c.b16 %v1603, %v1602
    %v1609 = vsel %vm217, %v1588, 0
    %1611 = vmatprep.subr.bf16.mxu0 0
    %1612 = vmatpush1.bf16.msra.mxu0 %v1604
    %1613 = vmatprep.subr.bf16.mxu0 0
    %1614 = vmatpush1.bf16.msra.mxu0 %v1605
    %1615 = vmatprep.subr.bf16.mxu0 0
    %1616 = vmatpush1.bf16.msra.mxu0 0
    %1617 = vmatprep.subr.bf16.mxu0 0
    %1618 = vmatpush1.bf16.msra.mxu0 0
    %1619 = vmatprep.subr.bf16.mxu0 0
    %1620 = vmatpush1.bf16.msra.mxu0 0
    %1621 = vmatprep.subr.bf16.mxu0 0
    %1622 = vmatpush1.bf16.msra.mxu0 0
    %1623 = vmatprep.subr.bf16.mxu0 0
    %1624 = vmatpush1.bf16.msra.mxu0 0
    %1625 = vmatprep.subr.bf16.mxu0 0
    %1626 = vmatpush1.bf16.msra.mxu0 0
    %1627 = vmatprep.subr.bf16.mxu0 0
    %1628 = vmatpush1.bf16.msra.mxu0 0
    %1629 = vmatprep.subr.bf16.mxu0 0
    %1630 = vmatpush1.bf16.msra.mxu0 0
    %1631 = vmatprep.subr.bf16.mxu0 0
    %1632 = vmatpush1.bf16.msra.mxu0 0
    %1633 = vmatprep.subr.bf16.mxu0 0
    %1634 = vmatpush1.bf16.msra.mxu0 0
    %1635 = vmatprep.subr.bf16.mxu0 0
    %1636 = vmatpush1.bf16.msra.mxu0 0
    %1637 = vmatprep.subr.bf16.mxu0 0
    %1638 = vmatpush1.bf16.msra.mxu0 0
    %1639 = vmatprep.subr.bf16.mxu0 0
    %1640 = vmatpush1.bf16.msra.mxu0 0
    %1641 = vmatprep.subr.bf16.mxu0 0
    %1642 = vmatpush1.bf16.msra.mxu0 0
    %1643 = vmatprep.mubr.bf16.mxu0 0
    %1644 = vmatmul.mubr.bf16.gmra.mrb[0].mxu0 %v1609
    %v1645 = vpop.f32.mrb[0].mxu0
    %v1646 = vadd.f32 %v1594, %v1645
    %v1647 = vpop.f32.mrb[0].mxu0
    %v1648 = vpop.f32.mrb[0].mxu0
    %v1649 = vpop.f32.mrb[0].mxu0
    %1650 = vdwg.mxu0
    %v1651 = vtanh.pop %v1646
    %v1652 = vld [vmem:[%s21] sm:$0xf]
    %v1653 = vld [vmem:[%s21 + $0x4] sm:$0xf]
    %v1654 = vld [vmem:[%s21 + $0x8] sm:$0xf]
    %v1655 = vld [vmem:[%s21 + $0xc] sm:$0xf]
    %v1656 = vpack.c.bf16 %v1651, %v1651
    %v1657 = vld [vmem:[%s22] sm:$0x1]
    %v1659 = vlaneseq
    %v1660 = vshrl.u32 %v1659, 7
    %v1661 = vsub.s32 0, %v1660
    %v1662 = vrot.slane %v1657, %v1661
    %v1668 = vunpack.c.l.b16 %v1652
    %v1669 = vunpack.c.l.b16 %v1653
    %v1670 = vunpack.c.l.b16 %v1654
    %v1671 = vunpack.c.l.b16 %v1655
    %v1672 = vpack.c.b16 %v1669, %v1668
    %v1673 = vpack.c.b16 %v1671, %v1670
    %v1677 = vsel %vm217, %v1656, 0
    %1679 = vmatprep.subr.bf16.mxu0 0
    %1680 = vmatpush1.bf16.msra.mxu0 %v1672
    %1681 = vmatprep.subr.bf16.mxu0 0
    %1682 = vmatpush1.bf16.msra.mxu0 %v1673
    %1683 = vmatprep.subr.bf16.mxu0 0
    %1684 = vmatpush1.bf16.msra.mxu0 0
    %1685 = vmatprep.subr.bf16.mxu0 0
    %1686 = vmatpush1.bf16.msra.mxu0 0
    %1687 = vmatprep.subr.bf16.mxu0 0
    %1688 = vmatpush1.bf16.msra.mxu0 0
    %1689 = vmatprep.subr.bf16.mxu0 0
    %1690 = vmatpush1.bf16.msra.mxu0 0
    %1691 = vmatprep.subr.bf16.mxu0 0
    %1692 = vmatpush1.bf16.msra.mxu0 0
    %1693 = vmatprep.subr.bf16.mxu0 0
    %1694 = vmatpush1.bf16.msra.mxu0 0
    %1695 = vmatprep.subr.bf16.mxu0 0
    %1696 = vmatpush1.bf16.msra.mxu0 0
    %1697 = vmatprep.subr.bf16.mxu0 0
    %1698 = vmatpush1.bf16.msra.mxu0 0
    %1699 = vmatprep.subr.bf16.mxu0 0
    %1700 = vmatpush1.bf16.msra.mxu0 0
    %1701 = vmatprep.subr.bf16.mxu0 0
    %1702 = vmatpush1.bf16.msra.mxu0 0
    %1703 = vmatprep.subr.bf16.mxu0 0
    %1704 = vmatpush1.bf16.msra.mxu0 0
    %1705 = vmatprep.subr.bf16.mxu0 0
    %1706 = vmatpush1.bf16.msra.mxu0 0
    %1707 = vmatprep.subr.bf16.mxu0 0
    %1708 = vmatpush1.bf16.msra.mxu0 0
    %1709 = vmatprep.subr.bf16.mxu0 0
    %1710 = vmatpush1.bf16.msra.mxu0 0
    %1711 = vmatprep.mubr.bf16.mxu0 0
    %1712 = vmatmul.mubr.bf16.gmra.mrb[0].mxu0 %v1677
    %v1713 = vpop.f32.mrb[0].mxu0
    %v1714 = vadd.f32 %v1662, %v1713
    %v1715 = vpop.f32.mrb[0].mxu0
    %v1716 = vpop.f32.mrb[0].mxu0
    %v1717 = vpop.f32.mrb[0].mxu0
    %1718 = vdwg.mxu0
    %v1719 = vld [vmem:[%s2] sm:$0x3]
    %v1720 = vld [vmem:[%s23] sm:$0xf]
    %v1721 = vld [vmem:[%s23 + $0x4] sm:$0xf]
    %v1722 = vpack.c.bf16 %v1719, %v1719
    %v1723 = vld [vmem:[%s24] sm:$0x1]
    %v1725 = vlaneseq
    %v1726 = vshrl.u32 %v1725, 7
    %v1727 = vsub.s32 0, %v1726
    %v1728 = vrot.slane %v1723, %v1727
    %v1732 = vunpack.c.l.b16 %v1720
    %v1733 = vunpack.c.l.b16 %v1721
    %v1734 = vpack.c.b16 %v1733, %v1732
    %v1737 = vsel %vm388, %v1722, 0
    %1739 = vmatprep.subr.bf16.mxu0 0
    %1740 = vmatpush1.bf16.msra.mxu0 %v1734
    %1741 = vmatprep.subr.bf16.mxu0 0
    %1742 = vmatpush1.bf16.msra.mxu0 0
    %1743 = vmatprep.subr.bf16.mxu0 0
    %1744 = vmatpush1.bf16.msra.mxu0 0
    %1745 = vmatprep.subr.bf16.mxu0 0
    %1746 = vmatpush1.bf16.msra.mxu0 0
    %1747 = vmatprep.subr.bf16.mxu0 0
    %1748 = vmatpush1.bf16.msra.mxu0 0
    %1749 = vmatprep.subr.bf16.mxu0 0
    %1750 = vmatpush1.bf16.msra.mxu0 0
    %1751 = vmatprep.subr.bf16.mxu0 0
    %1752 = vmatpush1.bf16.msra.mxu0 0
    %1753 = vmatprep.subr.bf16.mxu0 0
    %1754 = vmatpush1.bf16.msra.mxu0 0
    %1755 = vmatprep.subr.bf16.mxu0 0
    %1756 = vmatpush1.bf16.msra.mxu0 0
    %1757 = vmatprep.subr.bf16.mxu0 0
    %1758 = vmatpush1.bf16.msra.mxu0 0
    %1759 = vmatprep.subr.bf16.mxu0 0
    %1760 = vmatpush1.bf16.msra.mxu0 0
    %1761 = vmatprep.subr.bf16.mxu0 0
    %1762 = vmatpush1.bf16.msra.mxu0 0
    %1763 = vmatprep.subr.bf16.mxu0 0
    %1764 = vmatpush1.bf16.msra.mxu0 0
    %1765 = vmatprep.subr.bf16.mxu0 0
    %1766 = vmatpush1.bf16.msra.mxu0 0
    %1767 = vmatprep.subr.bf16.mxu0 0
    %1768 = vmatpush1.bf16.msra.mxu0 0
    %1769 = vmatprep.subr.bf16.mxu0 0
    %1770 = vmatpush1.bf16.msra.mxu0 0
    %1771 = vmatprep.mubr.bf16.mxu0 0
    %1772 = vmatmul.mubr.bf16.gmra.mrb[0].mxu0 %v1737
    %v1773 = vpop.f32.mrb[0].mxu0
    %v1774 = vadd.f32 %v1728, %v1773
    %v1775 = vpop.f32.mrb[0].mxu0
    %v1776 = vpop.f32.mrb[0].mxu0
    %v1777 = vpop.f32.mrb[0].mxu0
    %1778 = vdwg.mxu0
    %v1779 = vld [vmem:[%s25] sm:$0xf]
    %v1780 = vld [vmem:[%s25 + $0x4] sm:$0xf]
    %v1781 = vld [vmem:[%s25 + $0x8] sm:$0xf]
    %v1782 = vld [vmem:[%s25 + $0xc] sm:$0xf]
    %v1783 = vld [vmem:[%s25 + $0x10] sm:$0xf]
    %v1784 = vld [vmem:[%s25 + $0x14] sm:$0xf]
    %v1785 = vld [vmem:[%s25 + $0x18] sm:$0xf]
    %v1786 = vld [vmem:[%s25 + $0x1c] sm:$0xf]
    %v1787 = vld [vmem:[%s25 + $0x20] sm:$0xf]
    %v1788 = vld [vmem:[%s25 + $0x24] sm:$0xf]
    %v1789 = vld [vmem:[%s25 + $0x28] sm:$0xf]
    %v1790 = vld [vmem:[%s25 + $0x2c] sm:$0xf]
    %v1791 = vld [vmem:[%s25 + $0x30] sm:$0xf]
    %v1792 = vld [vmem:[%s25 + $0x34] sm:$0xf]
    %v1793 = vld [vmem:[%s25 + $0x38] sm:$0xf]
    %v1794 = vld [vmem:[%s25 + $0x3c] sm:$0xf]
    %v1795 = vpack.c.bf16 %v1714, %v1714
    %v1796 = vld [vmem:[%s26] sm:$0xf]
    %v1797 = vld [vmem:[%s26 + $0x4] sm:$0xf]
    %v1798 = vld [vmem:[%s26 + $0x8] sm:$0xf]
    %v1799 = vld [vmem:[%s26 + $0xc] sm:$0xf]
    %v1800 = vpack.c.bf16 %v1774, %v1774
    %v1805 = vunpack.c.l.b16 %v1796
    %v1806 = vunpack.c.l.b16 %v1797
    %v1807 = vunpack.c.l.b16 %v1798
    %v1808 = vunpack.c.l.b16 %v1799
    %v1809 = vpack.c.b16 %v1806, %v1805
    %v1810 = vpack.c.b16 %v1808, %v1807
    %v1814 = vsel %vm217, %v1800, 0
    %1816 = vmatprep.subr.bf16.mxu0 0
    %1817 = vmatpush1.bf16.msra.mxu0 %v1809
    %1818 = vmatprep.subr.bf16.mxu0 0
    %1819 = vmatpush1.bf16.msra.mxu0 %v1810
    %1820 = vmatprep.subr.bf16.mxu0 0
    %1821 = vmatpush1.bf16.msra.mxu0 0
    %1822 = vmatprep.subr.bf16.mxu0 0
    %1823 = vmatpush1.bf16.msra.mxu0 0
    %1824 = vmatprep.subr.bf16.mxu0 0
    %1825 = vmatpush1.bf16.msra.mxu0 0
    %1826 = vmatprep.subr.bf16.mxu0 0
    %1827 = vmatpush1.bf16.msra.mxu0 0
    %1828 = vmatprep.subr.bf16.mxu0 0
    %1829 = vmatpush1.bf16.msra.mxu0 0
    %1830 = vmatprep.subr.bf16.mxu0 0
    %1831 = vmatpush1.bf16.msra.mxu0 0
    %1832 = vmatprep.subr.bf16.mxu0 0
    %1833 = vmatpush1.bf16.msra.mxu0 0
    %1834 = vmatprep.subr.bf16.mxu0 0
    %1835 = vmatpush1.bf16.msra.mxu0 0
    %1836 = vmatprep.subr.bf16.mxu0 0
    %1837 = vmatpush1.bf16.msra.mxu0 0
    %1838 = vmatprep.subr.bf16.mxu0 0
    %1839 = vmatpush1.bf16.msra.mxu0 0
    %1840 = vmatprep.subr.bf16.mxu0 0
    %1841 = vmatpush1.bf16.msra.mxu0 0
    %1842 = vmatprep.subr.bf16.mxu0 0
    %1843 = vmatpush1.bf16.msra.mxu0 0
    %1844 = vmatprep.subr.bf16.mxu0 0
    %1845 = vmatpush1.bf16.msra.mxu0 0
    %1846 = vmatprep.subr.bf16.mxu0 0
    %1847 = vmatpush1.bf16.msra.mxu0 0
    %1848 = vmatprep.mubr.bf16.mxu0 0
    %1849 = vmatmul.mubr.bf16.gmra.mrb[0].mxu0 %v1814
    %v1850 = vpop.f32.mrb[0].mxu0
    %v1851 = vadd.f32 0.0, %v1850
    %v1852 = vpop.f32.mrb[0].mxu0
    %v1853 = vpop.f32.mrb[0].mxu0
    %v1854 = vpop.f32.mrb[0].mxu0
    %1855 = vdwg.mxu0
    %v1872 = vunpack.c.l.b16 %v1779
    %v1873 = vunpack.c.l.b16 %v1780
    %v1874 = vunpack.c.l.b16 %v1781
    %v1875 = vunpack.c.l.b16 %v1782
    %v1876 = vunpack.c.l.b16 %v1783
    %v1877 = vunpack.c.l.b16 %v1784
    %v1878 = vunpack.c.l.b16 %v1785
    %v1879 = vunpack.c.l.b16 %v1786
    %v1880 = vunpack.c.l.b16 %v1787
    %v1881 = vunpack.c.l.b16 %v1788
    %v1882 = vunpack.c.l.b16 %v1789
    %v1883 = vunpack.c.l.b16 %v1790
    %v1884 = vunpack.c.l.b16 %v1791
    %v1885 = vunpack.c.l.b16 %v1792
    %v1886 = vunpack.c.l.b16 %v1793
    %v1887 = vunpack.c.l.b16 %v1794
    %v1888 = vpack.c.b16 %v1873, %v1872
    %v1889 = vpack.c.b16 %v1875, %v1874
    %v1890 = vpack.c.b16 %v1877, %v1876
    %v1891 = vpack.c.b16 %v1879, %v1878
    %v1892 = vpack.c.b16 %v1881, %v1880
    %v1893 = vpack.c.b16 %v1883, %v1882
    %v1894 = vpack.c.b16 %v1885, %v1884
    %v1895 = vpack.c.b16 %v1887, %v1886
    %1904 = vmatprep.subr.bf16.mxu0 0
    %1905 = vmatpush1.bf16.msra.mxu0 %v1888
    %1906 = vmatprep.subr.bf16.mxu0 0
    %1907 = vmatpush1.bf16.msra.mxu0 %v1889
    %1908 = vmatprep.subr.bf16.mxu0 0
    %1909 = vmatpush1.bf16.msra.mxu0 %v1890
    %1910 = vmatprep.subr.bf16.mxu0 0
    %1911 = vmatpush1.bf16.msra.mxu0 %v1891
    %1912 = vmatprep.subr.bf16.mxu0 0
    %1913 = vmatpush1.bf16.msra.mxu0 %v1892
    %1914 = vmatprep.subr.bf16.mxu0 0
    %1915 = vmatpush1.bf16.msra.mxu0 %v1893
    %1916 = vmatprep.subr.bf16.mxu0 0
    %1917 = vmatpush1.bf16.msra.mxu0 %v1894
    %1918 = vmatprep.subr.bf16.mxu0 0
    %1919 = vmatpush1.bf16.msra.mxu0 %v1895
    %1920 = vmatprep.subr.bf16.mxu0 0
    %1921 = vmatpush1.bf16.msra.mxu0 0
    %1922 = vmatprep.subr.bf16.mxu0 0
    %1923 = vmatpush1.bf16.msra.mxu0 0
    %1924 = vmatprep.subr.bf16.mxu0 0
    %1925 = vmatpush1.bf16.msra.mxu0 0
    %1926 = vmatprep.subr.bf16.mxu0 0
    %1927 = vmatpush1.bf16.msra.mxu0 0
    %1928 = vmatprep.subr.bf16.mxu0 0
    %1929 = vmatpush1.bf16.msra.mxu0 0
    %1930 = vmatprep.subr.bf16.mxu0 0
    %1931 = vmatpush1.bf16.msra.mxu0 0
    %1932 = vmatprep.subr.bf16.mxu0 0
    %1933 = vmatpush1.bf16.msra.mxu0 0
    %1934 = vmatprep.subr.bf16.mxu0 0
    %1935 = vmatpush1.bf16.msra.mxu0 0
    %1936 = vmatprep.mubr.bf16.mxu0 0
    %1937 = vmatmul.mubr.bf16.gmra.mrb[0].mxu0 %v1795
    %v1938 = vpop.f32.mrb[0].mxu0
    %v1939 = vadd.f32 %v1851, %v1938
    %v1940 = vpop.f32.mrb[0].mxu0
    %v1941 = vpop.f32.mrb[0].mxu0
    %v1942 = vpop.f32.mrb[0].mxu0
    %1943 = vdwg.mxu0
    %v1944 = vld [vmem:[%s27] sm:$0x1]
    %v1946 = vlaneseq
    %v1947 = vshrl.u32 %v1946, 7
    %v1948 = vsub.s32 0, %v1947
    %v1949 = vrot.slane %v1944, %v1948
    %v1951 = vadd.f32 %v1939, %v1949
    %vm1952 = vcmask 25600
    %1953 = vst.msk [vmem:[#allocation2] sm:$0x3] %vm1952, %v1951
    // Predicated region
    $region114: #{bert_with_emoji_forward.1} parent=1 // pred_check
      _
    $region115: #{bert_with_emoji_forward.1} parent=1 // pred_check_branch
      %1955 = sbr.rel (0) target = $region117
    $region116: #{bert_with_emoji_forward.1} parent=1 // pred_region
      %s1957 = ssub.s32 32, 32
      %1958 = vsyncadd [#allocation3], %s1957
      %s1960 = sshll.u32 [#allocation2], 4
      %s1961 = int_to_ptr.vmem [resolvable:$true] %s1960
      %1963 = dma.vmem_to_hbm [thread:$0]  %s1961, 32, %s28, [#allocation3]
    $region117: #{bert_with_emoji_forward.1} parent=1 // pred_fallthru
      _
    // Predicated region
    $region118: #{bert_with_emoji_forward.1} parent=1 // pred_check
      _
    $region119: #{bert_with_emoji_forward.1} parent=1 // pred_check_branch
      %1965 = sbr.rel (0) target = $region121
    $region120: #{bert_with_emoji_forward.1} parent=1 // pred_region
      %1966 = dma.done [#allocation3], 32
    $region121: #{bert_with_emoji_forward.1} parent=1 // pred_fallthru
      _
    %1967 = vsyncpa [#allocation3], 1

</llo_original>
